<compile_context>
chip_gen: v7x
topology: tpu7x:2x2x1
jax: 0.10.0
libtpu: 0.0.40
codegen_flags: <defaults>
</compile_context>

<pallas_src>
import functools

import jax
import jax.numpy as jnp
import numpy as np
from jax.experimental import pallas as pl
from jax.experimental.pallas import tpu as pltpu


# ----------------------------------------------------------------------------
# Fused Pallas kernel: all LSTM layers + fc + tanh, single invocation.
# ----------------------------------------------------------------------------
def _actor_lstm_fused_kernel(*refs, num_layers, if_train):
    x_ref = refs[0]
    layer_refs = refs[1:1 + 3 * num_layers]
    fcw_ref, fcb_ref, out_ref, hseq_ref, gates_ref = refs[1 + 3 * num_layers:]

    B, T, _ = x_ref.shape

    # One-time relayout: batch-first (B, T, D) -> time-major flat (T*B, D).
    # Rows are ordered [t=0 batch, t=1 batch, ...] so every per-step access
    # below is a contiguous static slice.
    xv = x_ref[...].astype(jnp.float32)
    x_tm = jnp.concatenate([xv[:, t, :] for t in range(T)], axis=0)

    h_last = None
    for layer in range(num_layers):
        wih_ref = layer_refs[3 * layer + 0]                  # (D_in, 4H)
        whh_ref = layer_refs[3 * layer + 1]                  # (H, 4H)
        b_ref = layer_refs[3 * layer + 2]                    # (1, 4H)
        H = whh_ref.shape[0]

        # Hoisted, time-independent input projection: one big MXU matmul into
        # the time-major gates scratch (T*B, 4H).
        inp = x_tm if layer == 0 else hseq_ref[...]          # (T*B, D_in)
        gates_ref[...] = (
            jnp.dot(inp, wih_ref[...], preferred_element_type=jnp.float32)
            + b_ref[...])

        whh = whh_ref[...]
        h = jnp.zeros((B, H), jnp.float32)
        c = jnp.zeros((B, H), jnp.float32)
        # Only materialise the hidden sequence when it is actually consumed
        # (next layer's input, or the if_train fc path).
        need_seq = (layer < num_layers - 1) or if_train

        for t in range(T):                                   # static unroll
            g = gates_ref[t * B:(t + 1) * B, :] + jnp.dot(
                h, whh, preferred_element_type=jnp.float32)  # (B, 4H)
            # Full-width activations: one sigmoid + one tanh over the whole
            # (B, 4H) gate vreg, then lane-slice the gates [i, f, g, o].
            sg = jax.nn.sigmoid(g)
            tg = jnp.tanh(g)
            i = sg[:, 0 * H:1 * H]
            f = sg[:, 1 * H:2 * H]
            o = sg[:, 3 * H:4 * H]
            gg = tg[:, 2 * H:3 * H]
            c = f * c + i * gg
            h = o * jnp.tanh(c)
            if need_seq:
                hseq_ref[t * B:(t + 1) * B, :] = h           # contiguous store
        h_last = h

    fcw = fcw_ref[...]                                       # (H, O)
    fcb = fcb_ref[...]                                       # (1, O)
    if if_train:
        O = fcw.shape[-1]
        # fc + tanh stay time-major; relayout to (B, T, O) exactly once here.
        y = jnp.tanh(
            jnp.dot(hseq_ref[...], fcw, preferred_element_type=jnp.float32)
            + fcb)                                           # (T*B, O)
        out_ref[...] = jnp.stack(
            [y[t * B:(t + 1) * B, :] for t in range(T)], axis=1
        ).astype(out_ref.dtype)                              # (B, T, O)
    else:
        y = jnp.tanh(
            jnp.dot(h_last, fcw, preferred_element_type=jnp.float32) + fcb)
        out_ref[...] = y.astype(out_ref.dtype)               # (B, O)


# ----------------------------------------------------------------------------
# Wrapper
# ----------------------------------------------------------------------------
@functools.partial(jax.jit, static_argnames=("if_train",))
def actor_lstm_forward(x, lstm_params, fc_w_t, fc_b, if_train=True):
    """Equivalent of Actor_LSTM.forward.

    x: (B, T, input_size) float32, batch_first like PyTorch nn.LSTM.
    lstm_params: tuple of (W_ih^T, W_hh^T, bias) per layer.
    Returns (B, T, output_size) if if_train else (B, output_size).
    """
    B, T, _ = x.shape
    num_layers = len(lstm_params)
    H = lstm_params[0][1].shape[0]
    O = fc_w_t.shape[1]

    flat_params = []
    for (wih_t, whh_t, bias) in lstm_params:
        flat_params.extend([wih_t, whh_t, bias])

    out_shape = (B, T, O) if if_train else (B, O)
    vmem = pl.BlockSpec(memory_space=pltpu.MemorySpace.VMEM)
    n_inputs = 1 + len(flat_params) + 2

    kernel = functools.partial(
        _actor_lstm_fused_kernel, num_layers=num_layers, if_train=if_train)

    # TODO(synk): for non-toy B (>= ~16), add a batch grid with
    # dimension_semantics=("parallel",) (2nd TensorCore on v7x) plus
    # vmem_limit_bytes / B-tiled BlockSpecs and bf16 weights; at B=2 the
    # grid-free, all-resident form is strictly faster.
    return pl.pallas_call(
        kernel,
        out_shape=jax.ShapeDtypeStruct(out_shape, x.dtype),
        in_specs=[vmem] * n_inputs,
        out_specs=vmem,
        scratch_shapes=[
            pltpu.VMEM((T * B, H), jnp.float32),       # time-major hidden seq
            pltpu.VMEM((T * B, 4 * H), jnp.float32),   # time-major gate proj
        ],
    )(x, *flat_params, fc_w_t, fc_b)


# ----------------------------------------------------------------------------
# Deterministic parameter construction (mirrors nn.LSTM / nn.Linear shapes)
# ----------------------------------------------------------------------------
def init_params(key, input_size, hidden_size, num_layers, output_size,
                init_w=0.0001):
    lstm_params = []
    k = 1.0 / np.sqrt(hidden_size)             # PyTorch LSTM default init
    for layer in range(num_layers):
        d_in = input_size if layer == 0 else hidden_size
        key, k1, k2, k3, k4 = jax.random.split(key, 5)
        w_ih = jax.random.uniform(k1, (4 * hidden_size, d_in),
                                  jnp.float32, -k, k)
        w_hh = jax.random.uniform(k2, (4 * hidden_size, hidden_size),
                                  jnp.float32, -k, k)
        b_ih = jax.random.uniform(k3, (4 * hidden_size,), jnp.float32, -k, k)
        b_hh = jax.random.uniform(k4, (4 * hidden_size,), jnp.float32, -k, k)
        lstm_params.append((w_ih.T, w_hh.T, (b_ih + b_hh)[None, :]))

    key, k5, k6 = jax.random.split(key, 3)
    fc_w = jax.random.uniform(k5, (output_size, hidden_size),
                              jnp.float32, -init_w, init_w)
    fc_b = jax.random.uniform(k6, (output_size,), jnp.float32, -init_w, init_w)
    return tuple(lstm_params), fc_w.T, fc_b[None, :]


# ----------------------------------------------------------------------------
# Pure-JAX reference (for correctness check)
# ----------------------------------------------------------------------------
def reference_forward(x, lstm_params, fc_w_t, fc_b, if_train=True):
    B, T, _ = x.shape
    seq = x
    for (wih_t, whh_t, bias) in lstm_params:
        H = whh_t.shape[0]
        h = jnp.zeros((B, H), jnp.float32)
        c = jnp.zeros((B, H), jnp.float32)
        outs = []
        for t in range(T):
            g = (jnp.dot(seq[:, t, :], wih_t, precision=jax.lax.Precision.HIGHEST)
                 + jnp.dot(h, whh_t, precision=jax.lax.Precision.HIGHEST)
                 + bias)
            i = jax.nn.sigmoid(g[:, 0 * H:1 * H])
            f = jax.nn.sigmoid(g[:, 1 * H:2 * H])
            gg = jnp.tanh(g[:, 2 * H:3 * H])
            o = jax.nn.sigmoid(g[:, 3 * H:4 * H])
            c = f * c + i * gg
            h = o * jnp.tanh(c)
            outs.append(h)
        seq = jnp.stack(outs, axis=1)          # (B, T, H)
    if if_train:
        y = jnp.dot(seq, fc_w_t, precision=jax.lax.Precision.HIGHEST) + fc_b
    else:
        y = jnp.dot(seq[:, -1, :], fc_w_t,
                    precision=jax.lax.Precision.HIGHEST) + fc_b
    return jnp.tanh(y)


# ----------------------------------------------------------------------------
if __name__ == "__main__":
    INPUT_SIZE = 16
    HIDDEN_SIZE = 32
    NUM_LAYERS = 2
    OUTPUT_SIZE = 4
    BATCH = 2
    SEQ = 8

    key = jax.random.PRNGKey(0)
    key, pkey, xkey = jax.random.split(key, 3)
    lstm_params, fc_w_t, fc_b = init_params(
        pkey, INPUT_SIZE, HIDDEN_SIZE, NUM_LAYERS, OUTPUT_SIZE)

    x = jax.random.normal(xkey, (BATCH, SEQ, INPUT_SIZE), jnp.float32)

    # if_train=True path: (B, T, output_size)
    out_train = actor_lstm_forward(x, lstm_params, fc_w_t, fc_b, if_train=True)
    out_train = jax.block_until_ready(out_train)
    assert out_train.shape == (BATCH, SEQ, OUTPUT_SIZE)

    # if_train=False path: (B, output_size)
    out_eval = actor_lstm_forward(x, lstm_params, fc_w_t, fc_b, if_train=False)
    out_eval = jax.block_until_ready(out_eval)
    assert out_eval.shape == (BATCH, OUTPUT_SIZE)

    # Correctness vs pure-JAX reference.  Tolerance (2e-4) documents the gap
    # between the kernel's default (single-pass) MXU precision and the
    # reference's Precision.HIGHEST at H=32, |w| <= 0.18.
    ref_train = reference_forward(x, lstm_params, fc_w_t, fc_b, if_train=True)
    ref_eval = reference_forward(x, lstm_params, fc_w_t, fc_b, if_train=False)
    np.testing.assert_allclose(np.asarray(out_train), np.asarray(ref_train),
                               atol=2e-4, rtol=2e-4)
    np.testing.assert_allclose(np.asarray(out_eval), np.asarray(ref_eval),
                               atol=2e-4, rtol=2e-4)

    print("KERNEL_OK")
</pallas_src>

<mosaic_0001>
module attributes {stable_mosaic.version = 11 : i64} {
  func.func @_actor_lstm_fused_kernel(%arg0: memref<2x8x16xf32, #tpu.memory_space<vmem>>, %arg1: memref<16x128xf32, #tpu.memory_space<vmem>>, %arg2: memref<32x128xf32, #tpu.memory_space<vmem>>, %arg3: memref<1x128xf32, #tpu.memory_space<vmem>>, %arg4: memref<32x128xf32, #tpu.memory_space<vmem>>, %arg5: memref<32x128xf32, #tpu.memory_space<vmem>>, %arg6: memref<1x128xf32, #tpu.memory_space<vmem>>, %arg7: memref<32x4xf32, #tpu.memory_space<vmem>>, %arg8: memref<1x4xf32, #tpu.memory_space<vmem>>, %arg9: memref<2x8x4xf32, #tpu.memory_space<vmem>>, %arg10: memref<16x32xf32, #tpu.memory_space<vmem>>, %arg11: memref<16x128xf32, #tpu.memory_space<vmem>>) attributes {dimension_semantics = [], scalar_prefetch = 0 : i64, scratch_operands = 2 : i64, tpu.core_type = #tpu.core_type<tc>} {
    %c0 = arith.constant 0 : index
    %c0_0 = arith.constant 0 : index
    %c0_1 = arith.constant 0 : index
    %0 = vector.load %arg0[%c0, %c0_0, %c0_1] : memref<2x8x16xf32, #tpu.memory_space<vmem>>, vector<2x8x16xf32>
    %1 = vector.extract_strided_slice %0 {offsets = [0, 0, 0], sizes = [2, 1, 16], strides = [1, 1, 1]} : vector<2x8x16xf32> to vector<2x1x16xf32>
    %2 = vector.shape_cast %1 : vector<2x1x16xf32> to vector<2x16xf32>
    %3 = vector.extract_strided_slice %0 {offsets = [0, 1, 0], sizes = [2, 1, 16], strides = [1, 1, 1]} : vector<2x8x16xf32> to vector<2x1x16xf32>
    %4 = vector.shape_cast %3 : vector<2x1x16xf32> to vector<2x16xf32>
    %5 = vector.extract_strided_slice %0 {offsets = [0, 2, 0], sizes = [2, 1, 16], strides = [1, 1, 1]} : vector<2x8x16xf32> to vector<2x1x16xf32>
    %6 = vector.shape_cast %5 : vector<2x1x16xf32> to vector<2x16xf32>
    %7 = vector.extract_strided_slice %0 {offsets = [0, 3, 0], sizes = [2, 1, 16], strides = [1, 1, 1]} : vector<2x8x16xf32> to vector<2x1x16xf32>
    %8 = vector.shape_cast %7 : vector<2x1x16xf32> to vector<2x16xf32>
    %9 = vector.extract_strided_slice %0 {offsets = [0, 4, 0], sizes = [2, 1, 16], strides = [1, 1, 1]} : vector<2x8x16xf32> to vector<2x1x16xf32>
    %10 = vector.shape_cast %9 : vector<2x1x16xf32> to vector<2x16xf32>
    %11 = vector.extract_strided_slice %0 {offsets = [0, 5, 0], sizes = [2, 1, 16], strides = [1, 1, 1]} : vector<2x8x16xf32> to vector<2x1x16xf32>
    %12 = vector.shape_cast %11 : vector<2x1x16xf32> to vector<2x16xf32>
    %13 = vector.extract_strided_slice %0 {offsets = [0, 6, 0], sizes = [2, 1, 16], strides = [1, 1, 1]} : vector<2x8x16xf32> to vector<2x1x16xf32>
    %14 = vector.shape_cast %13 : vector<2x1x16xf32> to vector<2x16xf32>
    %15 = vector.extract_strided_slice %0 {offsets = [0, 7, 0], sizes = [2, 1, 16], strides = [1, 1, 1]} : vector<2x8x16xf32> to vector<2x1x16xf32>
    %16 = vector.shape_cast %15 : vector<2x1x16xf32> to vector<2x16xf32>
    %17 = tpu.concatenate %2, %4, %6, %8, %10, %12, %14, %16 in 0 : vector<2x16xf32>, vector<2x16xf32>, vector<2x16xf32>, vector<2x16xf32>, vector<2x16xf32>, vector<2x16xf32>, vector<2x16xf32>, vector<2x16xf32> -> vector<16x16xf32>
    %c0_2 = arith.constant 0 : index
    %c0_3 = arith.constant 0 : index
    %18 = vector.load %arg1[%c0_2, %c0_3] : memref<16x128xf32, #tpu.memory_space<vmem>>, vector<16x128xf32>
    %cst = arith.constant dense<0.000000e+00> : vector<16x128xf32>
    %19 = tpu.matmul %17, %18, %cst {dimension_numbers = #tpu.dot_dimension_numbers<[1], [0], [0], [1], [0, 0, 1, 1], [], []>} : vector<16x16xf32>, vector<16x128xf32>, vector<16x128xf32> -> vector<16x128xf32>
    %c0_4 = arith.constant 0 : index
    %c0_5 = arith.constant 0 : index
    %20 = vector.load %arg3[%c0_4, %c0_5] : memref<1x128xf32, #tpu.memory_space<vmem>>, vector<1x128xf32>
    %21 = vector.broadcast %20 : vector<1x128xf32> to vector<16x128xf32>
    %22 = arith.addf %19, %21 : vector<16x128xf32>
    %c0_6 = arith.constant 0 : index
    %c0_7 = arith.constant 0 : index
    %23 = vector.load %arg11[%c0_6, %c0_7] : memref<16x128xf32, #tpu.memory_space<vmem>>, vector<16x128xf32>
    tpu.vector_store %arg11[%c0_6, %c0_7], %22 {strides = array<i32>} : memref<16x128xf32, #tpu.memory_space<vmem>>, vector<16x128xf32>,
    %c0_8 = arith.constant 0 : index
    %c0_9 = arith.constant 0 : index
    %24 = vector.load %arg2[%c0_8, %c0_9] : memref<32x128xf32, #tpu.memory_space<vmem>>, vector<32x128xf32>
    %cst_10 = arith.constant 0.000000e+00 : f32
    %25 = vector.broadcast %cst_10 : f32 to vector<2x32xf32>
    %cst_11 = arith.constant 0.000000e+00 : f32
    %26 = vector.broadcast %cst_11 : f32 to vector<2x32xf32>
    %c0_12 = arith.constant 0 : index
    %c0_13 = arith.constant 0 : index
    %27 = vector.load %arg11[%c0_12, %c0_13] : memref<16x128xf32, #tpu.memory_space<vmem>>, vector<2x128xf32>
    %cst_14 = arith.constant dense<0.000000e+00> : vector<2x128xf32>
    %28 = tpu.matmul %25, %24, %cst_14 {dimension_numbers = #tpu.dot_dimension_numbers<[1], [0], [0], [1], [0, 0, 1, 1], [], []>} : vector<2x32xf32>, vector<32x128xf32>, vector<2x128xf32> -> vector<2x128xf32>
    %29 = arith.addf %27, %28 : vector<2x128xf32>
    %30 = arith.negf %29 : vector<2x128xf32>
    %31 = math.exp %30 : vector<2x128xf32>
    %cst_15 = arith.constant 1.000000e+00 : f32
    %32 = vector.broadcast %cst_15 : f32 to vector<2x128xf32>
    %33 = arith.addf %32, %31 : vector<2x128xf32>
    %34 = arith.divf %32, %33 : vector<2x128xf32>
    %35 = math.tanh %29 : vector<2x128xf32>
    %36 = vector.extract_strided_slice %34 {offsets = [0, 0], sizes = [2, 32], strides = [1, 1]} : vector<2x128xf32> to vector<2x32xf32>
    %37 = vector.extract_strided_slice %34 {offsets = [0, 32], sizes = [2, 32], strides = [1, 1]} : vector<2x128xf32> to vector<2x32xf32>
    %38 = vector.extract_strided_slice %34 {offsets = [0, 96], sizes = [2, 32], strides = [1, 1]} : vector<2x128xf32> to vector<2x32xf32>
    %39 = vector.extract_strided_slice %35 {offsets = [0, 64], sizes = [2, 32], strides = [1, 1]} : vector<2x128xf32> to vector<2x32xf32>
    %40 = arith.mulf %37, %26 : vector<2x32xf32>
    %41 = arith.mulf %36, %39 : vector<2x32xf32>
    %42 = arith.addf %40, %41 : vector<2x32xf32>
    %43 = math.tanh %42 : vector<2x32xf32>
    %44 = arith.mulf %38, %43 : vector<2x32xf32>
    %c0_16 = arith.constant 0 : index
    %c0_17 = arith.constant 0 : index
    %45 = vector.load %arg10[%c0_16, %c0_17] : memref<16x32xf32, #tpu.memory_space<vmem>>, vector<2x32xf32>
    tpu.vector_store %arg10[%c0_16, %c0_17], %44 {strides = array<i32>} : memref<16x32xf32, #tpu.memory_space<vmem>>, vector<2x32xf32>,
    %c2 = arith.constant 2 : index
    %c0_18 = arith.constant 0 : index
    %46 = vector.load %arg11[%c2, %c0_18] : memref<16x128xf32, #tpu.memory_space<vmem>>, vector<2x128xf32>
    %cst_19 = arith.constant dense<0.000000e+00> : vector<2x128xf32>
    %47 = tpu.matmul %44, %24, %cst_19 {dimension_numbers = #tpu.dot_dimension_numbers<[1], [0], [0], [1], [0, 0, 1, 1], [], []>} : vector<2x32xf32>, vector<32x128xf32>, vector<2x128xf32> -> vector<2x128xf32>
    %48 = arith.addf %46, %47 : vector<2x128xf32>
    %49 = arith.negf %48 : vector<2x128xf32>
    %50 = math.exp %49 : vector<2x128xf32>
    %cst_20 = arith.constant 1.000000e+00 : f32
    %51 = vector.broadcast %cst_20 : f32 to vector<2x128xf32>
    %52 = arith.addf %51, %50 : vector<2x128xf32>
    %53 = arith.divf %51, %52 : vector<2x128xf32>
    %54 = math.tanh %48 : vector<2x128xf32>
    %55 = vector.extract_strided_slice %53 {offsets = [0, 0], sizes = [2, 32], strides = [1, 1]} : vector<2x128xf32> to vector<2x32xf32>
    %56 = vector.extract_strided_slice %53 {offsets = [0, 32], sizes = [2, 32], strides = [1, 1]} : vector<2x128xf32> to vector<2x32xf32>
    %57 = vector.extract_strided_slice %53 {offsets = [0, 96], sizes = [2, 32], strides = [1, 1]} : vector<2x128xf32> to vector<2x32xf32>
    %58 = vector.extract_strided_slice %54 {offsets = [0, 64], sizes = [2, 32], strides = [1, 1]} : vector<2x128xf32> to vector<2x32xf32>
    %59 = arith.mulf %56, %42 : vector<2x32xf32>
    %60 = arith.mulf %55, %58 : vector<2x32xf32>
    %61 = arith.addf %59, %60 : vector<2x32xf32>
    %62 = math.tanh %61 : vector<2x32xf32>
    %63 = arith.mulf %57, %62 : vector<2x32xf32>
    %c2_21 = arith.constant 2 : index
    %c0_22 = arith.constant 0 : index
    %64 = vector.load %arg10[%c2_21, %c0_22] : memref<16x32xf32, #tpu.memory_space<vmem>>, vector<2x32xf32>
    tpu.vector_store %arg10[%c2_21, %c0_22], %63 {strides = array<i32>} : memref<16x32xf32, #tpu.memory_space<vmem>>, vector<2x32xf32>,
    %c4 = arith.constant 4 : index
    %c0_23 = arith.constant 0 : index
    %65 = vector.load %arg11[%c4, %c0_23] : memref<16x128xf32, #tpu.memory_space<vmem>>, vector<2x128xf32>
    %cst_24 = arith.constant dense<0.000000e+00> : vector<2x128xf32>
    %66 = tpu.matmul %63, %24, %cst_24 {dimension_numbers = #tpu.dot_dimension_numbers<[1], [0], [0], [1], [0, 0, 1, 1], [], []>} : vector<2x32xf32>, vector<32x128xf32>, vector<2x128xf32> -> vector<2x128xf32>
    %67 = arith.addf %65, %66 : vector<2x128xf32>
    %68 = arith.negf %67 : vector<2x128xf32>
    %69 = math.exp %68 : vector<2x128xf32>
    %cst_25 = arith.constant 1.000000e+00 : f32
    %70 = vector.broadcast %cst_25 : f32 to vector<2x128xf32>
    %71 = arith.addf %70, %69 : vector<2x128xf32>
    %72 = arith.divf %70, %71 : vector<2x128xf32>
    %73 = math.tanh %67 : vector<2x128xf32>
    %74 = vector.extract_strided_slice %72 {offsets = [0, 0], sizes = [2, 32], strides = [1, 1]} : vector<2x128xf32> to vector<2x32xf32>
    %75 = vector.extract_strided_slice %72 {offsets = [0, 32], sizes = [2, 32], strides = [1, 1]} : vector<2x128xf32> to vector<2x32xf32>
    %76 = vector.extract_strided_slice %72 {offsets = [0, 96], sizes = [2, 32], strides = [1, 1]} : vector<2x128xf32> to vector<2x32xf32>
    %77 = vector.extract_strided_slice %73 {offsets = [0, 64], sizes = [2, 32], strides = [1, 1]} : vector<2x128xf32> to vector<2x32xf32>
    %78 = arith.mulf %75, %61 : vector<2x32xf32>
    %79 = arith.mulf %74, %77 : vector<2x32xf32>
    %80 = arith.addf %78, %79 : vector<2x32xf32>
    %81 = math.tanh %80 : vector<2x32xf32>
    %82 = arith.mulf %76, %81 : vector<2x32xf32>
    %c4_26 = arith.constant 4 : index
    %c0_27 = arith.constant 0 : index
    %83 = vector.load %arg10[%c4_26, %c0_27] : memref<16x32xf32, #tpu.memory_space<vmem>>, vector<2x32xf32>
    tpu.vector_store %arg10[%c4_26, %c0_27], %82 {strides = array<i32>} : memref<16x32xf32, #tpu.memory_space<vmem>>, vector<2x32xf32>,
    %c6 = arith.constant 6 : index
    %c0_28 = arith.constant 0 : index
    %84 = vector.load %arg11[%c6, %c0_28] : memref<16x128xf32, #tpu.memory_space<vmem>>, vector<2x128xf32>
    %cst_29 = arith.constant dense<0.000000e+00> : vector<2x128xf32>
    %85 = tpu.matmul %82, %24, %cst_29 {dimension_numbers = #tpu.dot_dimension_numbers<[1], [0], [0], [1], [0, 0, 1, 1], [], []>} : vector<2x32xf32>, vector<32x128xf32>, vector<2x128xf32> -> vector<2x128xf32>
    %86 = arith.addf %84, %85 : vector<2x128xf32>
    %87 = arith.negf %86 : vector<2x128xf32>
    %88 = math.exp %87 : vector<2x128xf32>
    %cst_30 = arith.constant 1.000000e+00 : f32
    %89 = vector.broadcast %cst_30 : f32 to vector<2x128xf32>
    %90 = arith.addf %89, %88 : vector<2x128xf32>
    %91 = arith.divf %89, %90 : vector<2x128xf32>
    %92 = math.tanh %86 : vector<2x128xf32>
    %93 = vector.extract_strided_slice %91 {offsets = [0, 0], sizes = [2, 32], strides = [1, 1]} : vector<2x128xf32> to vector<2x32xf32>
    %94 = vector.extract_strided_slice %91 {offsets = [0, 32], sizes = [2, 32], strides = [1, 1]} : vector<2x128xf32> to vector<2x32xf32>
    %95 = vector.extract_strided_slice %91 {offsets = [0, 96], sizes = [2, 32], strides = [1, 1]} : vector<2x128xf32> to vector<2x32xf32>
    %96 = vector.extract_strided_slice %92 {offsets = [0, 64], sizes = [2, 32], strides = [1, 1]} : vector<2x128xf32> to vector<2x32xf32>
    %97 = arith.mulf %94, %80 : vector<2x32xf32>
    %98 = arith.mulf %93, %96 : vector<2x32xf32>
    %99 = arith.addf %97, %98 : vector<2x32xf32>
    %100 = math.tanh %99 : vector<2x32xf32>
    %101 = arith.mulf %95, %100 : vector<2x32xf32>
    %c6_31 = arith.constant 6 : index
    %c0_32 = arith.constant 0 : index
    %102 = vector.load %arg10[%c6_31, %c0_32] : memref<16x32xf32, #tpu.memory_space<vmem>>, vector<2x32xf32>
    tpu.vector_store %arg10[%c6_31, %c0_32], %101 {strides = array<i32>} : memref<16x32xf32, #tpu.memory_space<vmem>>, vector<2x32xf32>,
    %c8 = arith.constant 8 : index
    %c0_33 = arith.constant 0 : index
    %103 = vector.load %arg11[%c8, %c0_33] : memref<16x128xf32, #tpu.memory_space<vmem>>, vector<2x128xf32>
    %cst_34 = arith.constant dense<0.000000e+00> : vector<2x128xf32>
    %104 = tpu.matmul %101, %24, %cst_34 {dimension_numbers = #tpu.dot_dimension_numbers<[1], [0], [0], [1], [0, 0, 1, 1], [], []>} : vector<2x32xf32>, vector<32x128xf32>, vector<2x128xf32> -> vector<2x128xf32>
    %105 = arith.addf %103, %104 : vector<2x128xf32>
    %106 = arith.negf %105 : vector<2x128xf32>
    %107 = math.exp %106 : vector<2x128xf32>
    %cst_35 = arith.constant 1.000000e+00 : f32
    %108 = vector.broadcast %cst_35 : f32 to vector<2x128xf32>
    %109 = arith.addf %108, %107 : vector<2x128xf32>
    %110 = arith.divf %108, %109 : vector<2x128xf32>
    %111 = math.tanh %105 : vector<2x128xf32>
    %112 = vector.extract_strided_slice %110 {offsets = [0, 0], sizes = [2, 32], strides = [1, 1]} : vector<2x128xf32> to vector<2x32xf32>
    %113 = vector.extract_strided_slice %110 {offsets = [0, 32], sizes = [2, 32], strides = [1, 1]} : vector<2x128xf32> to vector<2x32xf32>
    %114 = vector.extract_strided_slice %110 {offsets = [0, 96], sizes = [2, 32], strides = [1, 1]} : vector<2x128xf32> to vector<2x32xf32>
    %115 = vector.extract_strided_slice %111 {offsets = [0, 64], sizes = [2, 32], strides = [1, 1]} : vector<2x128xf32> to vector<2x32xf32>
    %116 = arith.mulf %113, %99 : vector<2x32xf32>
    %117 = arith.mulf %112, %115 : vector<2x32xf32>
    %118 = arith.addf %116, %117 : vector<2x32xf32>
    %119 = math.tanh %118 : vector<2x32xf32>
    %120 = arith.mulf %114, %119 : vector<2x32xf32>
    %c8_36 = arith.constant 8 : index
    %c0_37 = arith.constant 0 : index
    %121 = vector.load %arg10[%c8_36, %c0_37] : memref<16x32xf32, #tpu.memory_space<vmem>>, vector<2x32xf32>
    tpu.vector_store %arg10[%c8_36, %c0_37], %120 {strides = array<i32>} : memref<16x32xf32, #tpu.memory_space<vmem>>, vector<2x32xf32>,
    %c10 = arith.constant 10 : index
    %c0_38 = arith.constant 0 : index
    %122 = vector.load %arg11[%c10, %c0_38] : memref<16x128xf32, #tpu.memory_space<vmem>>, vector<2x128xf32>
    %cst_39 = arith.constant dense<0.000000e+00> : vector<2x128xf32>
    %123 = tpu.matmul %120, %24, %cst_39 {dimension_numbers = #tpu.dot_dimension_numbers<[1], [0], [0], [1], [0, 0, 1, 1], [], []>} : vector<2x32xf32>, vector<32x128xf32>, vector<2x128xf32> -> vector<2x128xf32>
    %124 = arith.addf %122, %123 : vector<2x128xf32>
    %125 = arith.negf %124 : vector<2x128xf32>
    %126 = math.exp %125 : vector<2x128xf32>
    %cst_40 = arith.constant 1.000000e+00 : f32
    %127 = vector.broadcast %cst_40 : f32 to vector<2x128xf32>
    %128 = arith.addf %127, %126 : vector<2x128xf32>
    %129 = arith.divf %127, %128 : vector<2x128xf32>
    %130 = math.tanh %124 : vector<2x128xf32>
    %131 = vector.extract_strided_slice %129 {offsets = [0, 0], sizes = [2, 32], strides = [1, 1]} : vector<2x128xf32> to vector<2x32xf32>
    %132 = vector.extract_strided_slice %129 {offsets = [0, 32], sizes = [2, 32], strides = [1, 1]} : vector<2x128xf32> to vector<2x32xf32>
    %133 = vector.extract_strided_slice %129 {offsets = [0, 96], sizes = [2, 32], strides = [1, 1]} : vector<2x128xf32> to vector<2x32xf32>
    %134 = vector.extract_strided_slice %130 {offsets = [0, 64], sizes = [2, 32], strides = [1, 1]} : vector<2x128xf32> to vector<2x32xf32>
    %135 = arith.mulf %132, %118 : vector<2x32xf32>
    %136 = arith.mulf %131, %134 : vector<2x32xf32>
    %137 = arith.addf %135, %136 : vector<2x32xf32>
    %138 = math.tanh %137 : vector<2x32xf32>
    %139 = arith.mulf %133, %138 : vector<2x32xf32>
    %c10_41 = arith.constant 10 : index
    %c0_42 = arith.constant 0 : index
    %140 = vector.load %arg10[%c10_41, %c0_42] : memref<16x32xf32, #tpu.memory_space<vmem>>, vector<2x32xf32>
    tpu.vector_store %arg10[%c10_41, %c0_42], %139 {strides = array<i32>} : memref<16x32xf32, #tpu.memory_space<vmem>>, vector<2x32xf32>,
    %c12 = arith.constant 12 : index
    %c0_43 = arith.constant 0 : index
    %141 = vector.load %arg11[%c12, %c0_43] : memref<16x128xf32, #tpu.memory_space<vmem>>, vector<2x128xf32>
    %cst_44 = arith.constant dense<0.000000e+00> : vector<2x128xf32>
    %142 = tpu.matmul %139, %24, %cst_44 {dimension_numbers = #tpu.dot_dimension_numbers<[1], [0], [0], [1], [0, 0, 1, 1], [], []>} : vector<2x32xf32>, vector<32x128xf32>, vector<2x128xf32> -> vector<2x128xf32>
    %143 = arith.addf %141, %142 : vector<2x128xf32>
    %144 = arith.negf %143 : vector<2x128xf32>
    %145 = math.exp %144 : vector<2x128xf32>
    %cst_45 = arith.constant 1.000000e+00 : f32
    %146 = vector.broadcast %cst_45 : f32 to vector<2x128xf32>
    %147 = arith.addf %146, %145 : vector<2x128xf32>
    %148 = arith.divf %146, %147 : vector<2x128xf32>
    %149 = math.tanh %143 : vector<2x128xf32>
    %150 = vector.extract_strided_slice %148 {offsets = [0, 0], sizes = [2, 32], strides = [1, 1]} : vector<2x128xf32> to vector<2x32xf32>
    %151 = vector.extract_strided_slice %148 {offsets = [0, 32], sizes = [2, 32], strides = [1, 1]} : vector<2x128xf32> to vector<2x32xf32>
    %152 = vector.extract_strided_slice %148 {offsets = [0, 96], sizes = [2, 32], strides = [1, 1]} : vector<2x128xf32> to vector<2x32xf32>
    %153 = vector.extract_strided_slice %149 {offsets = [0, 64], sizes = [2, 32], strides = [1, 1]} : vector<2x128xf32> to vector<2x32xf32>
    %154 = arith.mulf %151, %137 : vector<2x32xf32>
    %155 = arith.mulf %150, %153 : vector<2x32xf32>
    %156 = arith.addf %154, %155 : vector<2x32xf32>
    %157 = math.tanh %156 : vector<2x32xf32>
    %158 = arith.mulf %152, %157 : vector<2x32xf32>
    %c12_46 = arith.constant 12 : index
    %c0_47 = arith.constant 0 : index
    %159 = vector.load %arg10[%c12_46, %c0_47] : memref<16x32xf32, #tpu.memory_space<vmem>>, vector<2x32xf32>
    tpu.vector_store %arg10[%c12_46, %c0_47], %158 {strides = array<i32>} : memref<16x32xf32, #tpu.memory_space<vmem>>, vector<2x32xf32>,
    %c14 = arith.constant 14 : index
    %c0_48 = arith.constant 0 : index
    %160 = vector.load %arg11[%c14, %c0_48] : memref<16x128xf32, #tpu.memory_space<vmem>>, vector<2x128xf32>
    %cst_49 = arith.constant dense<0.000000e+00> : vector<2x128xf32>
    %161 = tpu.matmul %158, %24, %cst_49 {dimension_numbers = #tpu.dot_dimension_numbers<[1], [0], [0], [1], [0, 0, 1, 1], [], []>} : vector<2x32xf32>, vector<32x128xf32>, vector<2x128xf32> -> vector<2x128xf32>
    %162 = arith.addf %160, %161 : vector<2x128xf32>
    %163 = arith.negf %162 : vector<2x128xf32>
    %164 = math.exp %163 : vector<2x128xf32>
    %cst_50 = arith.constant 1.000000e+00 : f32
    %165 = vector.broadcast %cst_50 : f32 to vector<2x128xf32>
    %166 = arith.addf %165, %164 : vector<2x128xf32>
    %167 = arith.divf %165, %166 : vector<2x128xf32>
    %168 = math.tanh %162 : vector<2x128xf32>
    %169 = vector.extract_strided_slice %167 {offsets = [0, 0], sizes = [2, 32], strides = [1, 1]} : vector<2x128xf32> to vector<2x32xf32>
    %170 = vector.extract_strided_slice %167 {offsets = [0, 32], sizes = [2, 32], strides = [1, 1]} : vector<2x128xf32> to vector<2x32xf32>
    %171 = vector.extract_strided_slice %167 {offsets = [0, 96], sizes = [2, 32], strides = [1, 1]} : vector<2x128xf32> to vector<2x32xf32>
    %172 = vector.extract_strided_slice %168 {offsets = [0, 64], sizes = [2, 32], strides = [1, 1]} : vector<2x128xf32> to vector<2x32xf32>
    %173 = arith.mulf %170, %156 : vector<2x32xf32>
    %174 = arith.mulf %169, %172 : vector<2x32xf32>
    %175 = arith.addf %173, %174 : vector<2x32xf32>
    %176 = math.tanh %175 : vector<2x32xf32>
    %177 = arith.mulf %171, %176 : vector<2x32xf32>
    %c14_51 = arith.constant 14 : index
    %c0_52 = arith.constant 0 : index
    %178 = vector.load %arg10[%c14_51, %c0_52] : memref<16x32xf32, #tpu.memory_space<vmem>>, vector<2x32xf32>
    tpu.vector_store %arg10[%c14_51, %c0_52], %177 {strides = array<i32>} : memref<16x32xf32, #tpu.memory_space<vmem>>, vector<2x32xf32>,
    %c0_53 = arith.constant 0 : index
    %c0_54 = arith.constant 0 : index
    %179 = vector.load %arg10[%c0_53, %c0_54] : memref<16x32xf32, #tpu.memory_space<vmem>>, vector<16x32xf32>
    %c0_55 = arith.constant 0 : index
    %c0_56 = arith.constant 0 : index
    %180 = vector.load %arg4[%c0_55, %c0_56] : memref<32x128xf32, #tpu.memory_space<vmem>>, vector<32x128xf32>
    %cst_57 = arith.constant dense<0.000000e+00> : vector<16x128xf32>
    %181 = tpu.matmul %179, %180, %cst_57 {dimension_numbers = #tpu.dot_dimension_numbers<[1], [0], [0], [1], [0, 0, 1, 1], [], []>} : vector<16x32xf32>, vector<32x128xf32>, vector<16x128xf32> -> vector<16x128xf32>
    %c0_58 = arith.constant 0 : index
    %c0_59 = arith.constant 0 : index
    %182 = vector.load %arg6[%c0_58, %c0_59] : memref<1x128xf32, #tpu.memory_space<vmem>>, vector<1x128xf32>
    %183 = vector.broadcast %182 : vector<1x128xf32> to vector<16x128xf32>
    %184 = arith.addf %181, %183 : vector<16x128xf32>
    %c0_60 = arith.constant 0 : index
    %c0_61 = arith.constant 0 : index
    %185 = vector.load %arg11[%c0_60, %c0_61] : memref<16x128xf32, #tpu.memory_space<vmem>>, vector<16x128xf32>
    tpu.vector_store %arg11[%c0_60, %c0_61], %184 {strides = array<i32>} : memref<16x128xf32, #tpu.memory_space<vmem>>, vector<16x128xf32>,
    %c0_62 = arith.constant 0 : index
    %c0_63 = arith.constant 0 : index
    %186 = vector.load %arg5[%c0_62, %c0_63] : memref<32x128xf32, #tpu.memory_space<vmem>>, vector<32x128xf32>
    %cst_64 = arith.constant 0.000000e+00 : f32
    %187 = vector.broadcast %cst_64 : f32 to vector<2x32xf32>
    %cst_65 = arith.constant 0.000000e+00 : f32
    %188 = vector.broadcast %cst_65 : f32 to vector<2x32xf32>
    %c0_66 = arith.constant 0 : index
    %c0_67 = arith.constant 0 : index
    %189 = vector.load %arg11[%c0_66, %c0_67] : memref<16x128xf32, #tpu.memory_space<vmem>>, vector<2x128xf32>
    %cst_68 = arith.constant dense<0.000000e+00> : vector<2x128xf32>
    %190 = tpu.matmul %187, %186, %cst_68 {dimension_numbers = #tpu.dot_dimension_numbers<[1], [0], [0], [1], [0, 0, 1, 1], [], []>} : vector<2x32xf32>, vector<32x128xf32>, vector<2x128xf32> -> vector<2x128xf32>
    %191 = arith.addf %189, %190 : vector<2x128xf32>
    %192 = arith.negf %191 : vector<2x128xf32>
    %193 = math.exp %192 : vector<2x128xf32>
    %cst_69 = arith.constant 1.000000e+00 : f32
    %194 = vector.broadcast %cst_69 : f32 to vector<2x128xf32>
    %195 = arith.addf %194, %193 : vector<2x128xf32>
    %196 = arith.divf %194, %195 : vector<2x128xf32>
    %197 = math.tanh %191 : vector<2x128xf32>
    %198 = vector.extract_strided_slice %196 {offsets = [0, 0], sizes = [2, 32], strides = [1, 1]} : vector<2x128xf32> to vector<2x32xf32>
    %199 = vector.extract_strided_slice %196 {offsets = [0, 32], sizes = [2, 32], strides = [1, 1]} : vector<2x128xf32> to vector<2x32xf32>
    %200 = vector.extract_strided_slice %196 {offsets = [0, 96], sizes = [2, 32], strides = [1, 1]} : vector<2x128xf32> to vector<2x32xf32>
    %201 = vector.extract_strided_slice %197 {offsets = [0, 64], sizes = [2, 32], strides = [1, 1]} : vector<2x128xf32> to vector<2x32xf32>
    %202 = arith.mulf %199, %188 : vector<2x32xf32>
    %203 = arith.mulf %198, %201 : vector<2x32xf32>
    %204 = arith.addf %202, %203 : vector<2x32xf32>
    %205 = math.tanh %204 : vector<2x32xf32>
    %206 = arith.mulf %200, %205 : vector<2x32xf32>
    %c0_70 = arith.constant 0 : index
    %c0_71 = arith.constant 0 : index
    %207 = vector.load %arg10[%c0_70, %c0_71] : memref<16x32xf32, #tpu.memory_space<vmem>>, vector<2x32xf32>
    tpu.vector_store %arg10[%c0_70, %c0_71], %206 {strides = array<i32>} : memref<16x32xf32, #tpu.memory_space<vmem>>, vector<2x32xf32>,
    %c2_72 = arith.constant 2 : index
    %c0_73 = arith.constant 0 : index
    %208 = vector.load %arg11[%c2_72, %c0_73] : memref<16x128xf32, #tpu.memory_space<vmem>>, vector<2x128xf32>
    %cst_74 = arith.constant dense<0.000000e+00> : vector<2x128xf32>
    %209 = tpu.matmul %206, %186, %cst_74 {dimension_numbers = #tpu.dot_dimension_numbers<[1], [0], [0], [1], [0, 0, 1, 1], [], []>} : vector<2x32xf32>, vector<32x128xf32>, vector<2x128xf32> -> vector<2x128xf32>
    %210 = arith.addf %208, %209 : vector<2x128xf32>
    %211 = arith.negf %210 : vector<2x128xf32>
    %212 = math.exp %211 : vector<2x128xf32>
    %cst_75 = arith.constant 1.000000e+00 : f32
    %213 = vector.broadcast %cst_75 : f32 to vector<2x128xf32>
    %214 = arith.addf %213, %212 : vector<2x128xf32>
    %215 = arith.divf %213, %214 : vector<2x128xf32>
    %216 = math.tanh %210 : vector<2x128xf32>
    %217 = vector.extract_strided_slice %215 {offsets = [0, 0], sizes = [2, 32], strides = [1, 1]} : vector<2x128xf32> to vector<2x32xf32>
    %218 = vector.extract_strided_slice %215 {offsets = [0, 32], sizes = [2, 32], strides = [1, 1]} : vector<2x128xf32> to vector<2x32xf32>
    %219 = vector.extract_strided_slice %215 {offsets = [0, 96], sizes = [2, 32], strides = [1, 1]} : vector<2x128xf32> to vector<2x32xf32>
    %220 = vector.extract_strided_slice %216 {offsets = [0, 64], sizes = [2, 32], strides = [1, 1]} : vector<2x128xf32> to vector<2x32xf32>
    %221 = arith.mulf %218, %204 : vector<2x32xf32>
    %222 = arith.mulf %217, %220 : vector<2x32xf32>
    %223 = arith.addf %221, %222 : vector<2x32xf32>
    %224 = math.tanh %223 : vector<2x32xf32>
    %225 = arith.mulf %219, %224 : vector<2x32xf32>
    %c2_76 = arith.constant 2 : index
    %c0_77 = arith.constant 0 : index
    %226 = vector.load %arg10[%c2_76, %c0_77] : memref<16x32xf32, #tpu.memory_space<vmem>>, vector<2x32xf32>
    tpu.vector_store %arg10[%c2_76, %c0_77], %225 {strides = array<i32>} : memref<16x32xf32, #tpu.memory_space<vmem>>, vector<2x32xf32>,
    %c4_78 = arith.constant 4 : index
    %c0_79 = arith.constant 0 : index
    %227 = vector.load %arg11[%c4_78, %c0_79] : memref<16x128xf32, #tpu.memory_space<vmem>>, vector<2x128xf32>
    %cst_80 = arith.constant dense<0.000000e+00> : vector<2x128xf32>
    %228 = tpu.matmul %225, %186, %cst_80 {dimension_numbers = #tpu.dot_dimension_numbers<[1], [0], [0], [1], [0, 0, 1, 1], [], []>} : vector<2x32xf32>, vector<32x128xf32>, vector<2x128xf32> -> vector<2x128xf32>
    %229 = arith.addf %227, %228 : vector<2x128xf32>
    %230 = arith.negf %229 : vector<2x128xf32>
    %231 = math.exp %230 : vector<2x128xf32>
    %cst_81 = arith.constant 1.000000e+00 : f32
    %232 = vector.broadcast %cst_81 : f32 to vector<2x128xf32>
    %233 = arith.addf %232, %231 : vector<2x128xf32>
    %234 = arith.divf %232, %233 : vector<2x128xf32>
    %235 = math.tanh %229 : vector<2x128xf32>
    %236 = vector.extract_strided_slice %234 {offsets = [0, 0], sizes = [2, 32], strides = [1, 1]} : vector<2x128xf32> to vector<2x32xf32>
    %237 = vector.extract_strided_slice %234 {offsets = [0, 32], sizes = [2, 32], strides = [1, 1]} : vector<2x128xf32> to vector<2x32xf32>
    %238 = vector.extract_strided_slice %234 {offsets = [0, 96], sizes = [2, 32], strides = [1, 1]} : vector<2x128xf32> to vector<2x32xf32>
    %239 = vector.extract_strided_slice %235 {offsets = [0, 64], sizes = [2, 32], strides = [1, 1]} : vector<2x128xf32> to vector<2x32xf32>
    %240 = arith.mulf %237, %223 : vector<2x32xf32>
    %241 = arith.mulf %236, %239 : vector<2x32xf32>
    %242 = arith.addf %240, %241 : vector<2x32xf32>
    %243 = math.tanh %242 : vector<2x32xf32>
    %244 = arith.mulf %238, %243 : vector<2x32xf32>
    %c4_82 = arith.constant 4 : index
    %c0_83 = arith.constant 0 : index
    %245 = vector.load %arg10[%c4_82, %c0_83] : memref<16x32xf32, #tpu.memory_space<vmem>>, vector<2x32xf32>
    tpu.vector_store %arg10[%c4_82, %c0_83], %244 {strides = array<i32>} : memref<16x32xf32, #tpu.memory_space<vmem>>, vector<2x32xf32>,
    %c6_84 = arith.constant 6 : index
    %c0_85 = arith.constant 0 : index
    %246 = vector.load %arg11[%c6_84, %c0_85] : memref<16x128xf32, #tpu.memory_space<vmem>>, vector<2x128xf32>
    %cst_86 = arith.constant dense<0.000000e+00> : vector<2x128xf32>
    %247 = tpu.matmul %244, %186, %cst_86 {dimension_numbers = #tpu.dot_dimension_numbers<[1], [0], [0], [1], [0, 0, 1, 1], [], []>} : vector<2x32xf32>, vector<32x128xf32>, vector<2x128xf32> -> vector<2x128xf32>
    %248 = arith.addf %246, %247 : vector<2x128xf32>
    %249 = arith.negf %248 : vector<2x128xf32>
    %250 = math.exp %249 : vector<2x128xf32>
    %cst_87 = arith.constant 1.000000e+00 : f32
    %251 = vector.broadcast %cst_87 : f32 to vector<2x128xf32>
    %252 = arith.addf %251, %250 : vector<2x128xf32>
    %253 = arith.divf %251, %252 : vector<2x128xf32>
    %254 = math.tanh %248 : vector<2x128xf32>
    %255 = vector.extract_strided_slice %253 {offsets = [0, 0], sizes = [2, 32], strides = [1, 1]} : vector<2x128xf32> to vector<2x32xf32>
    %256 = vector.extract_strided_slice %253 {offsets = [0, 32], sizes = [2, 32], strides = [1, 1]} : vector<2x128xf32> to vector<2x32xf32>
    %257 = vector.extract_strided_slice %253 {offsets = [0, 96], sizes = [2, 32], strides = [1, 1]} : vector<2x128xf32> to vector<2x32xf32>
    %258 = vector.extract_strided_slice %254 {offsets = [0, 64], sizes = [2, 32], strides = [1, 1]} : vector<2x128xf32> to vector<2x32xf32>
    %259 = arith.mulf %256, %242 : vector<2x32xf32>
    %260 = arith.mulf %255, %258 : vector<2x32xf32>
    %261 = arith.addf %259, %260 : vector<2x32xf32>
    %262 = math.tanh %261 : vector<2x32xf32>
    %263 = arith.mulf %257, %262 : vector<2x32xf32>
    %c6_88 = arith.constant 6 : index
    %c0_89 = arith.constant 0 : index
    %264 = vector.load %arg10[%c6_88, %c0_89] : memref<16x32xf32, #tpu.memory_space<vmem>>, vector<2x32xf32>
    tpu.vector_store %arg10[%c6_88, %c0_89], %263 {strides = array<i32>} : memref<16x32xf32, #tpu.memory_space<vmem>>, vector<2x32xf32>,
    %c8_90 = arith.constant 8 : index
    %c0_91 = arith.constant 0 : index
    %265 = vector.load %arg11[%c8_90, %c0_91] : memref<16x128xf32, #tpu.memory_space<vmem>>, vector<2x128xf32>
    %cst_92 = arith.constant dense<0.000000e+00> : vector<2x128xf32>
    %266 = tpu.matmul %263, %186, %cst_92 {dimension_numbers = #tpu.dot_dimension_numbers<[1], [0], [0], [1], [0, 0, 1, 1], [], []>} : vector<2x32xf32>, vector<32x128xf32>, vector<2x128xf32> -> vector<2x128xf32>
    %267 = arith.addf %265, %266 : vector<2x128xf32>
    %268 = arith.negf %267 : vector<2x128xf32>
    %269 = math.exp %268 : vector<2x128xf32>
    %cst_93 = arith.constant 1.000000e+00 : f32
    %270 = vector.broadcast %cst_93 : f32 to vector<2x128xf32>
    %271 = arith.addf %270, %269 : vector<2x128xf32>
    %272 = arith.divf %270, %271 : vector<2x128xf32>
    %273 = math.tanh %267 : vector<2x128xf32>
    %274 = vector.extract_strided_slice %272 {offsets = [0, 0], sizes = [2, 32], strides = [1, 1]} : vector<2x128xf32> to vector<2x32xf32>
    %275 = vector.extract_strided_slice %272 {offsets = [0, 32], sizes = [2, 32], strides = [1, 1]} : vector<2x128xf32> to vector<2x32xf32>
    %276 = vector.extract_strided_slice %272 {offsets = [0, 96], sizes = [2, 32], strides = [1, 1]} : vector<2x128xf32> to vector<2x32xf32>
    %277 = vector.extract_strided_slice %273 {offsets = [0, 64], sizes = [2, 32], strides = [1, 1]} : vector<2x128xf32> to vector<2x32xf32>
    %278 = arith.mulf %275, %261 : vector<2x32xf32>
    %279 = arith.mulf %274, %277 : vector<2x32xf32>
    %280 = arith.addf %278, %279 : vector<2x32xf32>
    %281 = math.tanh %280 : vector<2x32xf32>
    %282 = arith.mulf %276, %281 : vector<2x32xf32>
    %c8_94 = arith.constant 8 : index
    %c0_95 = arith.constant 0 : index
    %283 = vector.load %arg10[%c8_94, %c0_95] : memref<16x32xf32, #tpu.memory_space<vmem>>, vector<2x32xf32>
    tpu.vector_store %arg10[%c8_94, %c0_95], %282 {strides = array<i32>} : memref<16x32xf32, #tpu.memory_space<vmem>>, vector<2x32xf32>,
    %c10_96 = arith.constant 10 : index
    %c0_97 = arith.constant 0 : index
    %284 = vector.load %arg11[%c10_96, %c0_97] : memref<16x128xf32, #tpu.memory_space<vmem>>, vector<2x128xf32>
    %cst_98 = arith.constant dense<0.000000e+00> : vector<2x128xf32>
    %285 = tpu.matmul %282, %186, %cst_98 {dimension_numbers = #tpu.dot_dimension_numbers<[1], [0], [0], [1], [0, 0, 1, 1], [], []>} : vector<2x32xf32>, vector<32x128xf32>, vector<2x128xf32> -> vector<2x128xf32>
    %286 = arith.addf %284, %285 : vector<2x128xf32>
    %287 = arith.negf %286 : vector<2x128xf32>
    %288 = math.exp %287 : vector<2x128xf32>
    %cst_99 = arith.constant 1.000000e+00 : f32
    %289 = vector.broadcast %cst_99 : f32 to vector<2x128xf32>
    %290 = arith.addf %289, %288 : vector<2x128xf32>
    %291 = arith.divf %289, %290 : vector<2x128xf32>
    %292 = math.tanh %286 : vector<2x128xf32>
    %293 = vector.extract_strided_slice %291 {offsets = [0, 0], sizes = [2, 32], strides = [1, 1]} : vector<2x128xf32> to vector<2x32xf32>
    %294 = vector.extract_strided_slice %291 {offsets = [0, 32], sizes = [2, 32], strides = [1, 1]} : vector<2x128xf32> to vector<2x32xf32>
    %295 = vector.extract_strided_slice %291 {offsets = [0, 96], sizes = [2, 32], strides = [1, 1]} : vector<2x128xf32> to vector<2x32xf32>
    %296 = vector.extract_strided_slice %292 {offsets = [0, 64], sizes = [2, 32], strides = [1, 1]} : vector<2x128xf32> to vector<2x32xf32>
    %297 = arith.mulf %294, %280 : vector<2x32xf32>
    %298 = arith.mulf %293, %296 : vector<2x32xf32>
    %299 = arith.addf %297, %298 : vector<2x32xf32>
    %300 = math.tanh %299 : vector<2x32xf32>
    %301 = arith.mulf %295, %300 : vector<2x32xf32>
    %c10_100 = arith.constant 10 : index
    %c0_101 = arith.constant 0 : index
    %302 = vector.load %arg10[%c10_100, %c0_101] : memref<16x32xf32, #tpu.memory_space<vmem>>, vector<2x32xf32>
    tpu.vector_store %arg10[%c10_100, %c0_101], %301 {strides = array<i32>} : memref<16x32xf32, #tpu.memory_space<vmem>>, vector<2x32xf32>,
    %c12_102 = arith.constant 12 : index
    %c0_103 = arith.constant 0 : index
    %303 = vector.load %arg11[%c12_102, %c0_103] : memref<16x128xf32, #tpu.memory_space<vmem>>, vector<2x128xf32>
    %cst_104 = arith.constant dense<0.000000e+00> : vector<2x128xf32>
    %304 = tpu.matmul %301, %186, %cst_104 {dimension_numbers = #tpu.dot_dimension_numbers<[1], [0], [0], [1], [0, 0, 1, 1], [], []>} : vector<2x32xf32>, vector<32x128xf32>, vector<2x128xf32> -> vector<2x128xf32>
    %305 = arith.addf %303, %304 : vector<2x128xf32>
    %306 = arith.negf %305 : vector<2x128xf32>
    %307 = math.exp %306 : vector<2x128xf32>
    %cst_105 = arith.constant 1.000000e+00 : f32
    %308 = vector.broadcast %cst_105 : f32 to vector<2x128xf32>
    %309 = arith.addf %308, %307 : vector<2x128xf32>
    %310 = arith.divf %308, %309 : vector<2x128xf32>
    %311 = math.tanh %305 : vector<2x128xf32>
    %312 = vector.extract_strided_slice %310 {offsets = [0, 0], sizes = [2, 32], strides = [1, 1]} : vector<2x128xf32> to vector<2x32xf32>
    %313 = vector.extract_strided_slice %310 {offsets = [0, 32], sizes = [2, 32], strides = [1, 1]} : vector<2x128xf32> to vector<2x32xf32>
    %314 = vector.extract_strided_slice %310 {offsets = [0, 96], sizes = [2, 32], strides = [1, 1]} : vector<2x128xf32> to vector<2x32xf32>
    %315 = vector.extract_strided_slice %311 {offsets = [0, 64], sizes = [2, 32], strides = [1, 1]} : vector<2x128xf32> to vector<2x32xf32>
    %316 = arith.mulf %313, %299 : vector<2x32xf32>
    %317 = arith.mulf %312, %315 : vector<2x32xf32>
    %318 = arith.addf %316, %317 : vector<2x32xf32>
    %319 = math.tanh %318 : vector<2x32xf32>
    %320 = arith.mulf %314, %319 : vector<2x32xf32>
    %c12_106 = arith.constant 12 : index
    %c0_107 = arith.constant 0 : index
    %321 = vector.load %arg10[%c12_106, %c0_107] : memref<16x32xf32, #tpu.memory_space<vmem>>, vector<2x32xf32>
    tpu.vector_store %arg10[%c12_106, %c0_107], %320 {strides = array<i32>} : memref<16x32xf32, #tpu.memory_space<vmem>>, vector<2x32xf32>,
    %c14_108 = arith.constant 14 : index
    %c0_109 = arith.constant 0 : index
    %322 = vector.load %arg11[%c14_108, %c0_109] : memref<16x128xf32, #tpu.memory_space<vmem>>, vector<2x128xf32>
    %cst_110 = arith.constant dense<0.000000e+00> : vector<2x128xf32>
    %323 = tpu.matmul %320, %186, %cst_110 {dimension_numbers = #tpu.dot_dimension_numbers<[1], [0], [0], [1], [0, 0, 1, 1], [], []>} : vector<2x32xf32>, vector<32x128xf32>, vector<2x128xf32> -> vector<2x128xf32>
    %324 = arith.addf %322, %323 : vector<2x128xf32>
    %325 = arith.negf %324 : vector<2x128xf32>
    %326 = math.exp %325 : vector<2x128xf32>
    %cst_111 = arith.constant 1.000000e+00 : f32
    %327 = vector.broadcast %cst_111 : f32 to vector<2x128xf32>
    %328 = arith.addf %327, %326 : vector<2x128xf32>
    %329 = arith.divf %327, %328 : vector<2x128xf32>
    %330 = math.tanh %324 : vector<2x128xf32>
    %331 = vector.extract_strided_slice %329 {offsets = [0, 0], sizes = [2, 32], strides = [1, 1]} : vector<2x128xf32> to vector<2x32xf32>
    %332 = vector.extract_strided_slice %329 {offsets = [0, 32], sizes = [2, 32], strides = [1, 1]} : vector<2x128xf32> to vector<2x32xf32>
    %333 = vector.extract_strided_slice %329 {offsets = [0, 96], sizes = [2, 32], strides = [1, 1]} : vector<2x128xf32> to vector<2x32xf32>
    %334 = vector.extract_strided_slice %330 {offsets = [0, 64], sizes = [2, 32], strides = [1, 1]} : vector<2x128xf32> to vector<2x32xf32>
    %335 = arith.mulf %332, %318 : vector<2x32xf32>
    %336 = arith.mulf %331, %334 : vector<2x32xf32>
    %337 = arith.addf %335, %336 : vector<2x32xf32>
    %338 = math.tanh %337 : vector<2x32xf32>
    %339 = arith.mulf %333, %338 : vector<2x32xf32>
    %c14_112 = arith.constant 14 : index
    %c0_113 = arith.constant 0 : index
    %340 = vector.load %arg10[%c14_112, %c0_113] : memref<16x32xf32, #tpu.memory_space<vmem>>, vector<2x32xf32>
    tpu.vector_store %arg10[%c14_112, %c0_113], %339 {strides = array<i32>} : memref<16x32xf32, #tpu.memory_space<vmem>>, vector<2x32xf32>,
    %c0_114 = arith.constant 0 : index
    %c0_115 = arith.constant 0 : index
    %341 = vector.load %arg7[%c0_114, %c0_115] : memref<32x4xf32, #tpu.memory_space<vmem>>, vector<32x4xf32>
    %c0_116 = arith.constant 0 : index
    %c0_117 = arith.constant 0 : index
    %342 = vector.load %arg8[%c0_116, %c0_117] : memref<1x4xf32, #tpu.memory_space<vmem>>, vector<1x4xf32>
    %c0_118 = arith.constant 0 : index
    %c0_119 = arith.constant 0 : index
    %343 = vector.load %arg10[%c0_118, %c0_119] : memref<16x32xf32, #tpu.memory_space<vmem>>, vector<16x32xf32>
    %cst_120 = arith.constant dense<0.000000e+00> : vector<16x4xf32>
    %344 = tpu.matmul %343, %341, %cst_120 {dimension_numbers = #tpu.dot_dimension_numbers<[1], [0], [0], [1], [0, 0, 1, 1], [], []>} : vector<16x32xf32>, vector<32x4xf32>, vector<16x4xf32> -> vector<16x4xf32>
    %345 = vector.broadcast %342 : vector<1x4xf32> to vector<16x4xf32>
    %346 = arith.addf %344, %345 : vector<16x4xf32>
    %347 = math.tanh %346 : vector<16x4xf32>
    %348 = vector.extract_strided_slice %347 {offsets = [0, 0], sizes = [2, 4], strides = [1, 1]} : vector<16x4xf32> to vector<2x4xf32>
    %349 = vector.extract_strided_slice %347 {offsets = [2, 0], sizes = [2, 4], strides = [1, 1]} : vector<16x4xf32> to vector<2x4xf32>
    %350 = vector.extract_strided_slice %347 {offsets = [4, 0], sizes = [2, 4], strides = [1, 1]} : vector<16x4xf32> to vector<2x4xf32>
    %351 = vector.extract_strided_slice %347 {offsets = [6, 0], sizes = [2, 4], strides = [1, 1]} : vector<16x4xf32> to vector<2x4xf32>
    %352 = vector.extract_strided_slice %347 {offsets = [8, 0], sizes = [2, 4], strides = [1, 1]} : vector<16x4xf32> to vector<2x4xf32>
    %353 = vector.extract_strided_slice %347 {offsets = [10, 0], sizes = [2, 4], strides = [1, 1]} : vector<16x4xf32> to vector<2x4xf32>
    %354 = vector.extract_strided_slice %347 {offsets = [12, 0], sizes = [2, 4], strides = [1, 1]} : vector<16x4xf32> to vector<2x4xf32>
    %355 = vector.extract_strided_slice %347 {offsets = [14, 0], sizes = [2, 4], strides = [1, 1]} : vector<16x4xf32> to vector<2x4xf32>
    %356 = vector.shape_cast %348 : vector<2x4xf32> to vector<2x1x4xf32>
    %357 = vector.shape_cast %349 : vector<2x4xf32> to vector<2x1x4xf32>
    %358 = vector.shape_cast %350 : vector<2x4xf32> to vector<2x1x4xf32>
    %359 = vector.shape_cast %351 : vector<2x4xf32> to vector<2x1x4xf32>
    %360 = vector.shape_cast %352 : vector<2x4xf32> to vector<2x1x4xf32>
    %361 = vector.shape_cast %353 : vector<2x4xf32> to vector<2x1x4xf32>
    %362 = vector.shape_cast %354 : vector<2x4xf32> to vector<2x1x4xf32>
    %363 = vector.shape_cast %355 : vector<2x4xf32> to vector<2x1x4xf32>
    %364 = tpu.concatenate %356, %357, %358, %359, %360, %361, %362, %363 in 1 : vector<2x1x4xf32>, vector<2x1x4xf32>, vector<2x1x4xf32>, vector<2x1x4xf32>, vector<2x1x4xf32>, vector<2x1x4xf32>, vector<2x1x4xf32>, vector<2x1x4xf32> -> vector<2x8x4xf32>
    %c0_121 = arith.constant 0 : index
    %c0_122 = arith.constant 0 : index
    %c0_123 = arith.constant 0 : index
    %365 = vector.load %arg9[%c0_121, %c0_122, %c0_123] : memref<2x8x4xf32, #tpu.memory_space<vmem>>, vector<2x8x4xf32>
    tpu.vector_store %arg9[%c0_121, %c0_122, %c0_123], %364 {strides = array<i32>} : memref<2x8x4xf32, #tpu.memory_space<vmem>>, vector<2x8x4xf32>,
    return
  }
}

</mosaic_0001>

<llo_original>
// kernel: actor_lstm_forward.1
$region0: #{actor_lstm_forward.1}
  #allocation0 [shape = 'u32[]', space=smem, size = 0x4, offset = 0x4, fixed_abs, tag = 'smem constant byte address 0x4 - core index']
  #allocation1 [shape = 'u32[144,128]{1,0:T(1,128)}', space=vmem, size = 0x12000, scoped, tag = 'internal scratch']
  #allocation2 [shape = 'f32[16,32]{1,0:T(8,128)}', space=vmem, size = 0x2000, scoped, tag = 'scratch operand']
  #allocation3 [shape = 'f32[16,128]{1,0:T(8,128)}', space=vmem, size = 0x2000, scoped, tag = 'scratch operand']
  %s0 = inlined_call_operand.hbm [shape: f32[2,8,16], index: 0, kind: input, shape index: {}]
  %s1 = inlined_call_operand.hbm [shape: f32[16,128], index: 1, kind: input, shape index: {}]
  %s2 = inlined_call_operand.vmem [shape: f32[32,128], index: 2, kind: input, shape index: {}]
  %s3 = inlined_call_operand.vmem [shape: f32[1,128], index: 3, kind: input, shape index: {}]
  %s4 = inlined_call_operand.hbm [shape: f32[32,128], index: 4, kind: input, shape index: {}]
  %s5 = inlined_call_operand.hbm [shape: f32[32,128], index: 5, kind: input, shape index: {}]
  %s6 = inlined_call_operand.vmem [shape: f32[1,128], index: 6, kind: input, shape index: {}]
  %s7 = inlined_call_operand.vmem [shape: f32[32,4], index: 7, kind: input, shape index: {}]
  %s8 = inlined_call_operand.vmem [shape: f32[1,4], index: 8, kind: input, shape index: {}]
  %s9 = inlined_call_operand.vmem [shape: f32[2,8,4], index: 9, kind: output, shape index: {}]
  %s10 = sld [smem:[#allocation0]]
  $region62: #{actor_lstm_forward.1} parent=0
    _
  %s12 = ssub.s32 1, %s10
  %s13 = scalar_select 0, %s12, %s10
  $region1: #{actor_lstm_forward.1} parent=0
    #allocation4 [shape = 'u8[8192]{0}', space=vmem, size = 0x2000, scoped, tag = 'input window, operand 0, single buffered']
    #allocation5 [shape = 's32[1]{0}', space=sflag, size = 0x4, scoped, tag = 'scoped memory for actor_lstm_forward.1']
    #allocation6 [shape = 'u8[8192]{0}', space=vmem, size = 0x2000, scoped, tag = 'input window, operand 1, single buffered']
    #allocation7 [shape = 's32[1]{0}', space=sflag, size = 0x4, scoped, tag = 'scoped memory for actor_lstm_forward.1']
    #allocation8 [shape = 'u8[16384]{0}', space=vmem, size = 0x4000, scoped, tag = 'input window, operand 4, single buffered']
    #allocation9 [shape = 'u8[16384]{0}', space=vmem, size = 0x4000, scoped, tag = 'input window, operand 5, single buffered']
    #allocation10 [shape = 's32[1]{0}', space=sflag, size = 0x4, scoped, tag = 'scoped memory for actor_lstm_forward.1']
    %14 = vsyncpa [#allocation5], 0
    %15 = vsyncpa [#allocation7], 0
    %16 = vsyncpa [#allocation10], 0
    // Predicated region
    $region2: #{actor_lstm_forward.1} parent=1 // pred_check
      _
    $region3: #{actor_lstm_forward.1} parent=1 // pred_check_branch
      %18 = sbr.rel (0) target = $region5
    $region4: #{actor_lstm_forward.1} parent=1 // pred_region
      %s20 = ssub.s32 256, 256
      %21 = vsyncadd [#allocation5], %s20
      %s22 = sshll.u32 [#allocation4], 4
      %s23 = int_to_ptr.vmem [resolvable:$true] %s22
      %28 = dma.hbm_to_vmem [thread:$0]  %s0, 256, %s23, [#allocation5], 128, 128, 8
    $region5: #{actor_lstm_forward.1} parent=1 // pred_fallthru
      _
    // Predicated region
    $region6: #{actor_lstm_forward.1} parent=1 // pred_check
      _
    $region7: #{actor_lstm_forward.1} parent=1 // pred_check_branch
      %30 = sbr.rel (0) target = $region9
    $region8: #{actor_lstm_forward.1} parent=1 // pred_region
      %s32 = ssub.s32 256, 256
      %33 = vsyncadd [#allocation7], %s32
      %s34 = sshll.u32 [#allocation6], 4
      %s35 = int_to_ptr.vmem [resolvable:$true] %s34
      %40 = dma.hbm_to_vmem [thread:$0]  %s1, 256, %s35, [#allocation7], 128, 128, 8
    $region9: #{actor_lstm_forward.1} parent=1 // pred_fallthru
      _
    // Predicated region
    $region10: #{actor_lstm_forward.1} parent=1 // pred_check
      _
    $region11: #{actor_lstm_forward.1} parent=1 // pred_check_branch
      %42 = sbr.rel (0) target = $region13
    $region12: #{actor_lstm_forward.1} parent=1 // pred_region
      _
    $region13: #{actor_lstm_forward.1} parent=1 // pred_fallthru
      _
    // Predicated region
    $region14: #{actor_lstm_forward.1} parent=1 // pred_check
      _
    $region15: #{actor_lstm_forward.1} parent=1 // pred_check_branch
      %44 = sbr.rel (0) target = $region17
    $region16: #{actor_lstm_forward.1} parent=1 // pred_region
      _
    $region17: #{actor_lstm_forward.1} parent=1 // pred_fallthru
      _
    // Predicated region
    $region18: #{actor_lstm_forward.1} parent=1 // pred_check
      _
    $region19: #{actor_lstm_forward.1} parent=1 // pred_check_branch
      %46 = sbr.rel (0) target = $region21
    $region20: #{actor_lstm_forward.1} parent=1 // pred_region
      %s48 = ssub.s32 512, 512
      %49 = vsyncadd [#allocation7], %s48
      %s50 = sshll.u32 [#allocation8], 4
      %s51 = int_to_ptr.vmem [resolvable:$true] %s50
      %56 = dma.hbm_to_vmem [thread:$0]  %s4, 512, %s51, [#allocation7], 128, 128, 8
    $region21: #{actor_lstm_forward.1} parent=1 // pred_fallthru
      _
    // Predicated region
    $region22: #{actor_lstm_forward.1} parent=1 // pred_check
      _
    $region23: #{actor_lstm_forward.1} parent=1 // pred_check_branch
      %58 = sbr.rel (0) target = $region25
    $region24: #{actor_lstm_forward.1} parent=1 // pred_region
      %s60 = ssub.s32 512, 512
      %61 = vsyncadd [#allocation10], %s60
      %s62 = sshll.u32 [#allocation9], 4
      %s63 = int_to_ptr.vmem [resolvable:$true] %s62
      %68 = dma.hbm_to_vmem [thread:$0]  %s5, 512, %s63, [#allocation10], 128, 128, 8
    $region25: #{actor_lstm_forward.1} parent=1 // pred_fallthru
      _
    // Predicated region
    $region26: #{actor_lstm_forward.1} parent=1 // pred_check
      _
    $region27: #{actor_lstm_forward.1} parent=1 // pred_check_branch
      %70 = sbr.rel (0) target = $region29
    $region28: #{actor_lstm_forward.1} parent=1 // pred_region
      _
    $region29: #{actor_lstm_forward.1} parent=1 // pred_fallthru
      _
    // Predicated region
    $region30: #{actor_lstm_forward.1} parent=1 // pred_check
      _
    $region31: #{actor_lstm_forward.1} parent=1 // pred_check_branch
      %72 = sbr.rel (0) target = $region33
    $region32: #{actor_lstm_forward.1} parent=1 // pred_region
      _
    $region33: #{actor_lstm_forward.1} parent=1 // pred_fallthru
      _
    // Predicated region
    $region34: #{actor_lstm_forward.1} parent=1 // pred_check
      _
    $region35: #{actor_lstm_forward.1} parent=1 // pred_check_branch
      %74 = sbr.rel (0) target = $region37
    $region36: #{actor_lstm_forward.1} parent=1 // pred_region
      _
    $region37: #{actor_lstm_forward.1} parent=1 // pred_fallthru
      _
    // Predicated region
    $region38: #{actor_lstm_forward.1} parent=1 // pred_check
      _
    $region39: #{actor_lstm_forward.1} parent=1 // pred_check_branch
      %76 = sbr.rel (0) target = $region41
    $region40: #{actor_lstm_forward.1} parent=1 // pred_region
      %77 = dma.done [#allocation5], 256
    $region41: #{actor_lstm_forward.1} parent=1 // pred_fallthru
      _
    // Predicated region
    $region42: #{actor_lstm_forward.1} parent=1 // pred_check
      _
    $region43: #{actor_lstm_forward.1} parent=1 // pred_check_branch
      %79 = sbr.rel (0) target = $region45
    $region44: #{actor_lstm_forward.1} parent=1 // pred_region
      %80 = dma.done [#allocation7], 256
    $region45: #{actor_lstm_forward.1} parent=1 // pred_fallthru
      _
    // Predicated region
    $region46: #{actor_lstm_forward.1} parent=1 // pred_check
      _
    $region47: #{actor_lstm_forward.1} parent=1 // pred_check_branch
      %82 = sbr.rel (0) target = $region49
    $region48: #{actor_lstm_forward.1} parent=1 // pred_region
      %83 = dma.done [#allocation7], 512
    $region49: #{actor_lstm_forward.1} parent=1 // pred_fallthru
      _
    // Predicated region
    $region50: #{actor_lstm_forward.1} parent=1 // pred_check
      _
    $region51: #{actor_lstm_forward.1} parent=1 // pred_check_branch
      %85 = sbr.rel (0) target = $region53
    $region52: #{actor_lstm_forward.1} parent=1 // pred_region
      %86 = dma.done [#allocation10], 512
    $region53: #{actor_lstm_forward.1} parent=1 // pred_fallthru
      _
    %v87 = vld [vmem:[#allocation4] sm:$0xff]
    %v88 = vld [vmem:[#allocation4 + $0x8] sm:$0xff]
    %v91 = vrot.slane %v88, 7
    %vm92 = vcmask 1041409
    %v93 = vsel %vm92, %v91, %v87
    %v95 = vrot.slane %v87, 7
    %v96 = vrot.slane %v88, 6
    %vm97 = vcmask 1043459
    %v98 = vsel %vm97, %v96, %v95
    %v100 = vrot.slane %v87, 6
    %v101 = vrot.slane %v88, 5
    %vm102 = vcmask 1045509
    %v103 = vsel %vm102, %v101, %v100
    %v105 = vrot.slane %v87, 5
    %v106 = vrot.slane %v88, 4
    %vm107 = vcmask 1047559
    %v108 = vsel %vm107, %v106, %v105
    %v110 = vrot.slane %v87, 4
    %v111 = vrot.slane %v88, 3
    %v112 = vsel %vm92, %v111, %v110
    %v114 = vrot.slane %v87, 3
    %v115 = vrot.slane %v88, 2
    %v116 = vsel %vm97, %v115, %v114
    %v118 = vrot.slane %v87, 2
    %v119 = vrot.slane %v88, 1
    %v120 = vsel %vm102, %v119, %v118
    %v122 = vrot.slane %v87, 1
    %v123 = vsel %vm107, %v88, %v122
    %vm125 = vcmask 1041408
    %v126 = vsel %vm125, %v93, %v98
    %vm127 = vcmask 1043456
    %v128 = vsel %vm127, %v126, %v103
    %vm129 = vcmask 1045504
    %v130 = vsel %vm129, %v128, %v108
    %v131 = vsel %vm125, %v112, %v116
    %v132 = vsel %vm127, %v131, %v120
    %v133 = vsel %vm129, %v132, %v123
    %v134 = vld [vmem:[#allocation6] sm:$0xff]
    %v135 = vld [vmem:[#allocation6 + $0x8] sm:$0xff]
    %v136 = vld [vmem:[%s3] sm:$0x1]
    %v138 = vlaneseq
    %v139 = vshrl.u32 %v138, 7
    %v140 = vsub.s32 0, %v139
    %v141 = vrot.slane %v136, %v140
    %vm143 = vcmask 130048
    %v145 = vsel %vm143, %v130, 0
    %v148 = vsel %vm143, %v133, 0
    %150 = vmatprep.subr.mxu0 0.0
    %151 = vmatpush1.msra.mxu0 %v134
    %152 = vmatprep.subr.mxu0 0.0
    %153 = vmatpush1.msra.mxu0 %v135
    %154 = vmatprep.subr.mxu0 0.0
    %155 = vmatpush1.msra.mxu0 0.0
    %156 = vmatprep.subr.mxu0 0.0
    %157 = vmatpush1.msra.mxu0 0.0
    %158 = vmatprep.subr.mxu0 0.0
    %159 = vmatpush1.msra.mxu0 0.0
    %160 = vmatprep.subr.mxu0 0.0
    %161 = vmatpush1.msra.mxu0 0.0
    %162 = vmatprep.subr.mxu0 0.0
    %163 = vmatpush1.msra.mxu0 0.0
    %164 = vmatprep.subr.mxu0 0.0
    %165 = vmatpush1.msra.mxu0 0.0
    %166 = vmatprep.subr.mxu0 0.0
    %167 = vmatpush1.msra.mxu0 0.0
    %168 = vmatprep.subr.mxu0 0.0
    %169 = vmatpush1.msra.mxu0 0.0
    %170 = vmatprep.subr.mxu0 0.0
    %171 = vmatpush1.msra.mxu0 0.0
    %172 = vmatprep.subr.mxu0 0.0
    %173 = vmatpush1.msra.mxu0 0.0
    %174 = vmatprep.subr.mxu0 0.0
    %175 = vmatpush1.msra.mxu0 0.0
    %176 = vmatprep.subr.mxu0 0.0
    %177 = vmatpush1.msra.mxu0 0.0
    %178 = vmatprep.subr.mxu0 0.0
    %179 = vmatpush1.msra.mxu0 0.0
    %180 = vmatprep.subr.mxu0 0.0
    %181 = vmatpush1.msra.mxu0 0.0
    %182 = vmatprep.subr.mxu0 0.0
    %183 = vmatpush1.msra.mxu0 0.0
    %184 = vmatprep.subr.mxu0 0.0
    %185 = vmatpush1.msra.mxu0 0.0
    %186 = vmatprep.subr.mxu0 0.0
    %187 = vmatpush1.msra.mxu0 0.0
    %188 = vmatprep.subr.mxu0 0.0
    %189 = vmatpush1.msra.mxu0 0.0
    %190 = vmatprep.subr.mxu0 0.0
    %191 = vmatpush1.msra.mxu0 0.0
    %192 = vmatprep.subr.mxu0 0.0
    %193 = vmatpush1.msra.mxu0 0.0
    %194 = vmatprep.subr.mxu0 0.0
    %195 = vmatpush1.msra.mxu0 0.0
    %196 = vmatprep.subr.mxu0 0.0
    %197 = vmatpush1.msra.mxu0 0.0
    %198 = vmatprep.subr.mxu0 0.0
    %199 = vmatpush1.msra.mxu0 0.0
    %200 = vmatprep.subr.mxu0 0.0
    %201 = vmatpush1.msra.mxu0 0.0
    %202 = vmatprep.subr.mxu0 0.0
    %203 = vmatpush1.msra.mxu0 0.0
    %204 = vmatprep.subr.mxu0 0.0
    %205 = vmatpush1.msra.mxu0 0.0
    %206 = vmatprep.subr.mxu0 0.0
    %207 = vmatpush1.msra.mxu0 0.0
    %208 = vmatprep.subr.mxu0 0.0
    %209 = vmatpush1.msra.mxu0 0.0
    %210 = vmatprep.subr.mxu0 0.0
    %211 = vmatpush1.msra.mxu0 0.0
    %212 = vmatprep.subr.mxu0 0.0
    %213 = vmatpush1.msra.mxu0 0.0
    %214 = vmatprep.mubr.f32.mxu0 0.0
    %215 = vmatmul.mubr.f32.gmra.mrb[0].mxu0 %v145
    %v216 = vpop.f32.mrb[0].mxu0
    %v217 = vadd.f32 %v141, %v216
    %v218 = vpop.f32.mrb[0].mxu0
    %219 = vmatprep.mubr.f32.mxu0 0.0
    %220 = vmatmul.mubr.f32.gmra.mrb[0].mxu0 %v148
    %v221 = vpop.f32.mrb[0].mxu0
    %v222 = vadd.f32 %v141, %v221
    %v223 = vpop.f32.mrb[0].mxu0
    %224 = vdwg.mxu0
    %225 = vst [vmem:[#allocation3] sm:$0xff] %v217
    %226 = vst [vmem:[#allocation3 + $0x8] sm:$0xff] %v222
    %v227 = vld [vmem:[%s2] sm:$0xff]
    %v228 = vld [vmem:[%s2 + $0x8] sm:$0xff]
    %v229 = vld [vmem:[%s2 + $0x10] sm:$0xff]
    %v230 = vld [vmem:[%s2 + $0x18] sm:$0xff]
    %v231 = vld [vmem:[#allocation3] sm:$0x3]
    %vm232 = vcmask 261120
    %v234 = vsel %vm232, 0.0, 0
    %236 = vmatprep.subr.mxu0 0.0
    %237 = vmatpush1.msra.mxu0 %v227
    %238 = vmatprep.subr.mxu0 0.0
    %239 = vmatpush1.msra.mxu0 %v228
    %240 = vmatprep.subr.mxu0 0.0
    %241 = vmatpush1.msra.mxu0 %v229
    %242 = vmatprep.subr.mxu0 0.0
    %243 = vmatpush1.msra.mxu0 %v230
    %244 = vmatprep.subr.mxu0 0.0
    %245 = vmatpush1.msra.mxu0 0.0
    %246 = vmatprep.subr.mxu0 0.0
    %247 = vmatpush1.msra.mxu0 0.0
    %248 = vmatprep.subr.mxu0 0.0
    %249 = vmatpush1.msra.mxu0 0.0
    %250 = vmatprep.subr.mxu0 0.0
    %251 = vmatpush1.msra.mxu0 0.0
    %252 = vmatprep.subr.mxu0 0.0
    %253 = vmatpush1.msra.mxu0 0.0
    %254 = vmatprep.subr.mxu0 0.0
    %255 = vmatpush1.msra.mxu0 0.0
    %256 = vmatprep.subr.mxu0 0.0
    %257 = vmatpush1.msra.mxu0 0.0
    %258 = vmatprep.subr.mxu0 0.0
    %259 = vmatpush1.msra.mxu0 0.0
    %260 = vmatprep.subr.mxu0 0.0
    %261 = vmatpush1.msra.mxu0 0.0
    %262 = vmatprep.subr.mxu0 0.0
    %263 = vmatpush1.msra.mxu0 0.0
    %264 = vmatprep.subr.mxu0 0.0
    %265 = vmatpush1.msra.mxu0 0.0
    %266 = vmatprep.subr.mxu0 0.0
    %267 = vmatpush1.msra.mxu0 0.0
    %268 = vmatprep.subr.mxu0 0.0
    %269 = vmatpush1.msra.mxu0 0.0
    %270 = vmatprep.subr.mxu0 0.0
    %271 = vmatpush1.msra.mxu0 0.0
    %272 = vmatprep.subr.mxu0 0.0
    %273 = vmatpush1.msra.mxu0 0.0
    %274 = vmatprep.subr.mxu0 0.0
    %275 = vmatpush1.msra.mxu0 0.0
    %276 = vmatprep.subr.mxu0 0.0
    %277 = vmatpush1.msra.mxu0 0.0
    %278 = vmatprep.subr.mxu0 0.0
    %279 = vmatpush1.msra.mxu0 0.0
    %280 = vmatprep.subr.mxu0 0.0
    %281 = vmatpush1.msra.mxu0 0.0
    %282 = vmatprep.subr.mxu0 0.0
    %283 = vmatpush1.msra.mxu0 0.0
    %284 = vmatprep.subr.mxu0 0.0
    %285 = vmatpush1.msra.mxu0 0.0
    %286 = vmatprep.subr.mxu0 0.0
    %287 = vmatpush1.msra.mxu0 0.0
    %288 = vmatprep.subr.mxu0 0.0
    %289 = vmatpush1.msra.mxu0 0.0
    %290 = vmatprep.subr.mxu0 0.0
    %291 = vmatpush1.msra.mxu0 0.0
    %292 = vmatprep.subr.mxu0 0.0
    %293 = vmatpush1.msra.mxu0 0.0
    %294 = vmatprep.subr.mxu0 0.0
    %295 = vmatpush1.msra.mxu0 0.0
    %296 = vmatprep.subr.mxu0 0.0
    %297 = vmatpush1.msra.mxu0 0.0
    %298 = vmatprep.subr.mxu0 0.0
    %299 = vmatpush1.msra.mxu0 0.0
    %300 = vmatprep.mubr.f32.mxu0 0.0
    %301 = vmatmul.mubr.f32.gmra.mrb[0].mxu0 %v234
    %v302 = vpop.f32.mrb[0].mxu0
    %v303 = vadd.f32 0.0, %v302
    %v304 = vpop.f32.mrb[0].mxu0
    %305 = vdwg.mxu0
    %v306 = vadd.f32 %v231, %v303
    %v307 = vxor.u32 %v306, 2147483648
    %v308 = vmul.f32 %v307, 1.442695
    %v309 = vpow.pop %v308
    %v310 = vadd.f32 %v309, 1.0
    %v311 = vrcp.pop %v310
    %v312 = vmul.f32 1.0, %v311
    %v313 = vtanh.pop %v306
    %v314 = vmul.f32 %v312, 0.0
    %316 = vrot.lane.b32.xlu0 %v313, 64
    %v317 = vpop.permute.xlu0 %316
    %v319 = vmul.f32 %v312, %v317
    %321 = vrot.lane.b32.xlu0 %v319, 32
    %v322 = vpop.permute.xlu0 %321
    %v324 = vadd.f32 %v314, %v322
    %v325 = vtanh.pop %v324
    %327 = vrot.lane.b32.xlu0 %v325, 64
    %v328 = vpop.permute.xlu0 %327
    %v330 = vmul.f32 %v312, %v328
    %332 = vrot.lane.b32.xlu0 %v330, 32
    %v333 = vpop.permute.xlu0 %332
    %vm335 = vcmask 254976
    %336 = vst.msk [vmem:[#allocation2] sm:$0x3] %vm335, %v333
    %v337 = vld [vmem:[#allocation3 + $0x2] sm:$0x3]
    %v338 = vsel %vm232, %v333, 0
    %340 = vmatprep.subr.mxu0 0.0
    %341 = vmatpush1.msra.mxu0 %v227
    %342 = vmatprep.subr.mxu0 0.0
    %343 = vmatpush1.msra.mxu0 %v228
    %344 = vmatprep.subr.mxu0 0.0
    %345 = vmatpush1.msra.mxu0 %v229
    %346 = vmatprep.subr.mxu0 0.0
    %347 = vmatpush1.msra.mxu0 %v230
    %348 = vmatprep.subr.mxu0 0.0
    %349 = vmatpush1.msra.mxu0 0.0
    %350 = vmatprep.subr.mxu0 0.0
    %351 = vmatpush1.msra.mxu0 0.0
    %352 = vmatprep.subr.mxu0 0.0
    %353 = vmatpush1.msra.mxu0 0.0
    %354 = vmatprep.subr.mxu0 0.0
    %355 = vmatpush1.msra.mxu0 0.0
    %356 = vmatprep.subr.mxu0 0.0
    %357 = vmatpush1.msra.mxu0 0.0
    %358 = vmatprep.subr.mxu0 0.0
    %359 = vmatpush1.msra.mxu0 0.0
    %360 = vmatprep.subr.mxu0 0.0
    %361 = vmatpush1.msra.mxu0 0.0
    %362 = vmatprep.subr.mxu0 0.0
    %363 = vmatpush1.msra.mxu0 0.0
    %364 = vmatprep.subr.mxu0 0.0
    %365 = vmatpush1.msra.mxu0 0.0
    %366 = vmatprep.subr.mxu0 0.0
    %367 = vmatpush1.msra.mxu0 0.0
    %368 = vmatprep.subr.mxu0 0.0
    %369 = vmatpush1.msra.mxu0 0.0
    %370 = vmatprep.subr.mxu0 0.0
    %371 = vmatpush1.msra.mxu0 0.0
    %372 = vmatprep.subr.mxu0 0.0
    %373 = vmatpush1.msra.mxu0 0.0
    %374 = vmatprep.subr.mxu0 0.0
    %375 = vmatpush1.msra.mxu0 0.0
    %376 = vmatprep.subr.mxu0 0.0
    %377 = vmatpush1.msra.mxu0 0.0
    %378 = vmatprep.subr.mxu0 0.0
    %379 = vmatpush1.msra.mxu0 0.0
    %380 = vmatprep.subr.mxu0 0.0
    %381 = vmatpush1.msra.mxu0 0.0
    %382 = vmatprep.subr.mxu0 0.0
    %383 = vmatpush1.msra.mxu0 0.0
    %384 = vmatprep.subr.mxu0 0.0
    %385 = vmatpush1.msra.mxu0 0.0
    %386 = vmatprep.subr.mxu0 0.0
    %387 = vmatpush1.msra.mxu0 0.0
    %388 = vmatprep.subr.mxu0 0.0
    %389 = vmatpush1.msra.mxu0 0.0
    %390 = vmatprep.subr.mxu0 0.0
    %391 = vmatpush1.msra.mxu0 0.0
    %392 = vmatprep.subr.mxu0 0.0
    %393 = vmatpush1.msra.mxu0 0.0
    %394 = vmatprep.subr.mxu0 0.0
    %395 = vmatpush1.msra.mxu0 0.0
    %396 = vmatprep.subr.mxu0 0.0
    %397 = vmatpush1.msra.mxu0 0.0
    %398 = vmatprep.subr.mxu0 0.0
    %399 = vmatpush1.msra.mxu0 0.0
    %400 = vmatprep.subr.mxu0 0.0
    %401 = vmatpush1.msra.mxu0 0.0
    %402 = vmatprep.subr.mxu0 0.0
    %403 = vmatpush1.msra.mxu0 0.0
    %404 = vmatprep.mubr.f32.mxu0 0.0
    %405 = vmatmul.mubr.f32.gmra.mrb[0].mxu0 %v338
    %v406 = vpop.f32.mrb[0].mxu0
    %v407 = vadd.f32 0.0, %v406
    %v408 = vpop.f32.mrb[0].mxu0
    %409 = vdwg.mxu0
    %v410 = vadd.f32 %v337, %v407
    %v411 = vxor.u32 %v410, 2147483648
    %v412 = vmul.f32 %v411, 1.442695
    %v413 = vpow.pop %v412
    %v414 = vadd.f32 %v413, 1.0
    %v415 = vrcp.pop %v414
    %v416 = vmul.f32 1.0, %v415
    %v417 = vtanh.pop %v410
    %v418 = vmul.f32 %v416, %v324
    %420 = vrot.lane.b32.xlu0 %v417, 64
    %v421 = vpop.permute.xlu0 %420
    %v423 = vmul.f32 %v416, %v421
    %425 = vrot.lane.b32.xlu0 %v423, 32
    %v426 = vpop.permute.xlu0 %425
    %v428 = vadd.f32 %v418, %v426
    %v429 = vtanh.pop %v428
    %431 = vrot.lane.b32.xlu0 %v429, 64
    %v432 = vpop.permute.xlu0 %431
    %v434 = vmul.f32 %v416, %v432
    %436 = vrot.lane.b32.xlu0 %v434, 32
    %v437 = vpop.permute.xlu0 %436
    %439 = vst.msk [vmem:[#allocation2 + $0x2] sm:$0x3] %vm335, %v437
    %v440 = vld [vmem:[#allocation3 + $0x4] sm:$0x3]
    %v441 = vsel %vm232, %v437, 0
    %443 = vmatprep.subr.mxu0 0.0
    %444 = vmatpush1.msra.mxu0 %v227
    %445 = vmatprep.subr.mxu0 0.0
    %446 = vmatpush1.msra.mxu0 %v228
    %447 = vmatprep.subr.mxu0 0.0
    %448 = vmatpush1.msra.mxu0 %v229
    %449 = vmatprep.subr.mxu0 0.0
    %450 = vmatpush1.msra.mxu0 %v230
    %451 = vmatprep.subr.mxu0 0.0
    %452 = vmatpush1.msra.mxu0 0.0
    %453 = vmatprep.subr.mxu0 0.0
    %454 = vmatpush1.msra.mxu0 0.0
    %455 = vmatprep.subr.mxu0 0.0
    %456 = vmatpush1.msra.mxu0 0.0
    %457 = vmatprep.subr.mxu0 0.0
    %458 = vmatpush1.msra.mxu0 0.0
    %459 = vmatprep.subr.mxu0 0.0
    %460 = vmatpush1.msra.mxu0 0.0
    %461 = vmatprep.subr.mxu0 0.0
    %462 = vmatpush1.msra.mxu0 0.0
    %463 = vmatprep.subr.mxu0 0.0
    %464 = vmatpush1.msra.mxu0 0.0
    %465 = vmatprep.subr.mxu0 0.0
    %466 = vmatpush1.msra.mxu0 0.0
    %467 = vmatprep.subr.mxu0 0.0
    %468 = vmatpush1.msra.mxu0 0.0
    %469 = vmatprep.subr.mxu0 0.0
    %470 = vmatpush1.msra.mxu0 0.0
    %471 = vmatprep.subr.mxu0 0.0
    %472 = vmatpush1.msra.mxu0 0.0
    %473 = vmatprep.subr.mxu0 0.0
    %474 = vmatpush1.msra.mxu0 0.0
    %475 = vmatprep.subr.mxu0 0.0
    %476 = vmatpush1.msra.mxu0 0.0
    %477 = vmatprep.subr.mxu0 0.0
    %478 = vmatpush1.msra.mxu0 0.0
    %479 = vmatprep.subr.mxu0 0.0
    %480 = vmatpush1.msra.mxu0 0.0
    %481 = vmatprep.subr.mxu0 0.0
    %482 = vmatpush1.msra.mxu0 0.0
    %483 = vmatprep.subr.mxu0 0.0
    %484 = vmatpush1.msra.mxu0 0.0
    %485 = vmatprep.subr.mxu0 0.0
    %486 = vmatpush1.msra.mxu0 0.0
    %487 = vmatprep.subr.mxu0 0.0
    %488 = vmatpush1.msra.mxu0 0.0
    %489 = vmatprep.subr.mxu0 0.0
    %490 = vmatpush1.msra.mxu0 0.0
    %491 = vmatprep.subr.mxu0 0.0
    %492 = vmatpush1.msra.mxu0 0.0
    %493 = vmatprep.subr.mxu0 0.0
    %494 = vmatpush1.msra.mxu0 0.0
    %495 = vmatprep.subr.mxu0 0.0
    %496 = vmatpush1.msra.mxu0 0.0
    %497 = vmatprep.subr.mxu0 0.0
    %498 = vmatpush1.msra.mxu0 0.0
    %499 = vmatprep.subr.mxu0 0.0
    %500 = vmatpush1.msra.mxu0 0.0
    %501 = vmatprep.subr.mxu0 0.0
    %502 = vmatpush1.msra.mxu0 0.0
    %503 = vmatprep.subr.mxu0 0.0
    %504 = vmatpush1.msra.mxu0 0.0
    %505 = vmatprep.subr.mxu0 0.0
    %506 = vmatpush1.msra.mxu0 0.0
    %507 = vmatprep.mubr.f32.mxu0 0.0
    %508 = vmatmul.mubr.f32.gmra.mrb[0].mxu0 %v441
    %v509 = vpop.f32.mrb[0].mxu0
    %v510 = vadd.f32 0.0, %v509
    %v511 = vpop.f32.mrb[0].mxu0
    %512 = vdwg.mxu0
    %v513 = vadd.f32 %v440, %v510
    %v514 = vxor.u32 %v513, 2147483648
    %v515 = vmul.f32 %v514, 1.442695
    %v516 = vpow.pop %v515
    %v517 = vadd.f32 %v516, 1.0
    %v518 = vrcp.pop %v517
    %v519 = vmul.f32 1.0, %v518
    %v520 = vtanh.pop %v513
    %v521 = vmul.f32 %v519, %v428
    %523 = vrot.lane.b32.xlu0 %v520, 64
    %v524 = vpop.permute.xlu0 %523
    %v526 = vmul.f32 %v519, %v524
    %528 = vrot.lane.b32.xlu0 %v526, 32
    %v529 = vpop.permute.xlu0 %528
    %v531 = vadd.f32 %v521, %v529
    %v532 = vtanh.pop %v531
    %534 = vrot.lane.b32.xlu0 %v532, 64
    %v535 = vpop.permute.xlu0 %534
    %v537 = vmul.f32 %v519, %v535
    %539 = vrot.lane.b32.xlu0 %v537, 32
    %v540 = vpop.permute.xlu0 %539
    %542 = vst.msk [vmem:[#allocation2 + $0x4] sm:$0x3] %vm335, %v540
    %v543 = vld [vmem:[#allocation3 + $0x6] sm:$0x3]
    %v544 = vsel %vm232, %v540, 0
    %546 = vmatprep.subr.mxu0 0.0
    %547 = vmatpush1.msra.mxu0 %v227
    %548 = vmatprep.subr.mxu0 0.0
    %549 = vmatpush1.msra.mxu0 %v228
    %550 = vmatprep.subr.mxu0 0.0
    %551 = vmatpush1.msra.mxu0 %v229
    %552 = vmatprep.subr.mxu0 0.0
    %553 = vmatpush1.msra.mxu0 %v230
    %554 = vmatprep.subr.mxu0 0.0
    %555 = vmatpush1.msra.mxu0 0.0
    %556 = vmatprep.subr.mxu0 0.0
    %557 = vmatpush1.msra.mxu0 0.0
    %558 = vmatprep.subr.mxu0 0.0
    %559 = vmatpush1.msra.mxu0 0.0
    %560 = vmatprep.subr.mxu0 0.0
    %561 = vmatpush1.msra.mxu0 0.0
    %562 = vmatprep.subr.mxu0 0.0
    %563 = vmatpush1.msra.mxu0 0.0
    %564 = vmatprep.subr.mxu0 0.0
    %565 = vmatpush1.msra.mxu0 0.0
    %566 = vmatprep.subr.mxu0 0.0
    %567 = vmatpush1.msra.mxu0 0.0
    %568 = vmatprep.subr.mxu0 0.0
    %569 = vmatpush1.msra.mxu0 0.0
    %570 = vmatprep.subr.mxu0 0.0
    %571 = vmatpush1.msra.mxu0 0.0
    %572 = vmatprep.subr.mxu0 0.0
    %573 = vmatpush1.msra.mxu0 0.0
    %574 = vmatprep.subr.mxu0 0.0
    %575 = vmatpush1.msra.mxu0 0.0
    %576 = vmatprep.subr.mxu0 0.0
    %577 = vmatpush1.msra.mxu0 0.0
    %578 = vmatprep.subr.mxu0 0.0
    %579 = vmatpush1.msra.mxu0 0.0
    %580 = vmatprep.subr.mxu0 0.0
    %581 = vmatpush1.msra.mxu0 0.0
    %582 = vmatprep.subr.mxu0 0.0
    %583 = vmatpush1.msra.mxu0 0.0
    %584 = vmatprep.subr.mxu0 0.0
    %585 = vmatpush1.msra.mxu0 0.0
    %586 = vmatprep.subr.mxu0 0.0
    %587 = vmatpush1.msra.mxu0 0.0
    %588 = vmatprep.subr.mxu0 0.0
    %589 = vmatpush1.msra.mxu0 0.0
    %590 = vmatprep.subr.mxu0 0.0
    %591 = vmatpush1.msra.mxu0 0.0
    %592 = vmatprep.subr.mxu0 0.0
    %593 = vmatpush1.msra.mxu0 0.0
    %594 = vmatprep.subr.mxu0 0.0
    %595 = vmatpush1.msra.mxu0 0.0
    %596 = vmatprep.subr.mxu0 0.0
    %597 = vmatpush1.msra.mxu0 0.0
    %598 = vmatprep.subr.mxu0 0.0
    %599 = vmatpush1.msra.mxu0 0.0
    %600 = vmatprep.subr.mxu0 0.0
    %601 = vmatpush1.msra.mxu0 0.0
    %602 = vmatprep.subr.mxu0 0.0
    %603 = vmatpush1.msra.mxu0 0.0
    %604 = vmatprep.subr.mxu0 0.0
    %605 = vmatpush1.msra.mxu0 0.0
    %606 = vmatprep.subr.mxu0 0.0
    %607 = vmatpush1.msra.mxu0 0.0
    %608 = vmatprep.subr.mxu0 0.0
    %609 = vmatpush1.msra.mxu0 0.0
    %610 = vmatprep.mubr.f32.mxu0 0.0
    %611 = vmatmul.mubr.f32.gmra.mrb[0].mxu0 %v544
    %v612 = vpop.f32.mrb[0].mxu0
    %v613 = vadd.f32 0.0, %v612
    %v614 = vpop.f32.mrb[0].mxu0
    %615 = vdwg.mxu0
    %v616 = vadd.f32 %v543, %v613
    %v617 = vxor.u32 %v616, 2147483648
    %v618 = vmul.f32 %v617, 1.442695
    %v619 = vpow.pop %v618
    %v620 = vadd.f32 %v619, 1.0
    %v621 = vrcp.pop %v620
    %v622 = vmul.f32 1.0, %v621
    %v623 = vtanh.pop %v616
    %v624 = vmul.f32 %v622, %v531
    %626 = vrot.lane.b32.xlu0 %v623, 64
    %v627 = vpop.permute.xlu0 %626
    %v629 = vmul.f32 %v622, %v627
    %631 = vrot.lane.b32.xlu0 %v629, 32
    %v632 = vpop.permute.xlu0 %631
    %v634 = vadd.f32 %v624, %v632
    %v635 = vtanh.pop %v634
    %637 = vrot.lane.b32.xlu0 %v635, 64
    %v638 = vpop.permute.xlu0 %637
    %v640 = vmul.f32 %v622, %v638
    %642 = vrot.lane.b32.xlu0 %v640, 32
    %v643 = vpop.permute.xlu0 %642
    %645 = vst.msk [vmem:[#allocation2 + $0x6] sm:$0x3] %vm335, %v643
    %v646 = vld [vmem:[#allocation3 + $0x8] sm:$0x3]
    %v647 = vsel %vm232, %v643, 0
    %649 = vmatprep.subr.mxu0 0.0
    %650 = vmatpush1.msra.mxu0 %v227
    %651 = vmatprep.subr.mxu0 0.0
    %652 = vmatpush1.msra.mxu0 %v228
    %653 = vmatprep.subr.mxu0 0.0
    %654 = vmatpush1.msra.mxu0 %v229
    %655 = vmatprep.subr.mxu0 0.0
    %656 = vmatpush1.msra.mxu0 %v230
    %657 = vmatprep.subr.mxu0 0.0
    %658 = vmatpush1.msra.mxu0 0.0
    %659 = vmatprep.subr.mxu0 0.0
    %660 = vmatpush1.msra.mxu0 0.0
    %661 = vmatprep.subr.mxu0 0.0
    %662 = vmatpush1.msra.mxu0 0.0
    %663 = vmatprep.subr.mxu0 0.0
    %664 = vmatpush1.msra.mxu0 0.0
    %665 = vmatprep.subr.mxu0 0.0
    %666 = vmatpush1.msra.mxu0 0.0
    %667 = vmatprep.subr.mxu0 0.0
    %668 = vmatpush1.msra.mxu0 0.0
    %669 = vmatprep.subr.mxu0 0.0
    %670 = vmatpush1.msra.mxu0 0.0
    %671 = vmatprep.subr.mxu0 0.0
    %672 = vmatpush1.msra.mxu0 0.0
    %673 = vmatprep.subr.mxu0 0.0
    %674 = vmatpush1.msra.mxu0 0.0
    %675 = vmatprep.subr.mxu0 0.0
    %676 = vmatpush1.msra.mxu0 0.0
    %677 = vmatprep.subr.mxu0 0.0
    %678 = vmatpush1.msra.mxu0 0.0
    %679 = vmatprep.subr.mxu0 0.0
    %680 = vmatpush1.msra.mxu0 0.0
    %681 = vmatprep.subr.mxu0 0.0
    %682 = vmatpush1.msra.mxu0 0.0
    %683 = vmatprep.subr.mxu0 0.0
    %684 = vmatpush1.msra.mxu0 0.0
    %685 = vmatprep.subr.mxu0 0.0
    %686 = vmatpush1.msra.mxu0 0.0
    %687 = vmatprep.subr.mxu0 0.0
    %688 = vmatpush1.msra.mxu0 0.0
    %689 = vmatprep.subr.mxu0 0.0
    %690 = vmatpush1.msra.mxu0 0.0
    %691 = vmatprep.subr.mxu0 0.0
    %692 = vmatpush1.msra.mxu0 0.0
    %693 = vmatprep.subr.mxu0 0.0
    %694 = vmatpush1.msra.mxu0 0.0
    %695 = vmatprep.subr.mxu0 0.0
    %696 = vmatpush1.msra.mxu0 0.0
    %697 = vmatprep.subr.mxu0 0.0
    %698 = vmatpush1.msra.mxu0 0.0
    %699 = vmatprep.subr.mxu0 0.0
    %700 = vmatpush1.msra.mxu0 0.0
    %701 = vmatprep.subr.mxu0 0.0
    %702 = vmatpush1.msra.mxu0 0.0
    %703 = vmatprep.subr.mxu0 0.0
    %704 = vmatpush1.msra.mxu0 0.0
    %705 = vmatprep.subr.mxu0 0.0
    %706 = vmatpush1.msra.mxu0 0.0
    %707 = vmatprep.subr.mxu0 0.0
    %708 = vmatpush1.msra.mxu0 0.0
    %709 = vmatprep.subr.mxu0 0.0
    %710 = vmatpush1.msra.mxu0 0.0
    %711 = vmatprep.subr.mxu0 0.0
    %712 = vmatpush1.msra.mxu0 0.0
    %713 = vmatprep.mubr.f32.mxu0 0.0
    %714 = vmatmul.mubr.f32.gmra.mrb[0].mxu0 %v647
    %v715 = vpop.f32.mrb[0].mxu0
    %v716 = vadd.f32 0.0, %v715
    %v717 = vpop.f32.mrb[0].mxu0
    %718 = vdwg.mxu0
    %v719 = vadd.f32 %v646, %v716
    %v720 = vxor.u32 %v719, 2147483648
    %v721 = vmul.f32 %v720, 1.442695
    %v722 = vpow.pop %v721
    %v723 = vadd.f32 %v722, 1.0
    %v724 = vrcp.pop %v723
    %v725 = vmul.f32 1.0, %v724
    %v726 = vtanh.pop %v719
    %v727 = vmul.f32 %v725, %v634
    %729 = vrot.lane.b32.xlu0 %v726, 64
    %v730 = vpop.permute.xlu0 %729
    %v732 = vmul.f32 %v725, %v730
    %734 = vrot.lane.b32.xlu0 %v732, 32
    %v735 = vpop.permute.xlu0 %734
    %v737 = vadd.f32 %v727, %v735
    %v738 = vtanh.pop %v737
    %740 = vrot.lane.b32.xlu0 %v738, 64
    %v741 = vpop.permute.xlu0 %740
    %v743 = vmul.f32 %v725, %v741
    %745 = vrot.lane.b32.xlu0 %v743, 32
    %v746 = vpop.permute.xlu0 %745
    %748 = vst.msk [vmem:[#allocation2 + $0x8] sm:$0x3] %vm335, %v746
    %v749 = vld [vmem:[#allocation3 + $0xa] sm:$0x3]
    %v750 = vsel %vm232, %v746, 0
    %752 = vmatprep.subr.mxu0 0.0
    %753 = vmatpush1.msra.mxu0 %v227
    %754 = vmatprep.subr.mxu0 0.0
    %755 = vmatpush1.msra.mxu0 %v228
    %756 = vmatprep.subr.mxu0 0.0
    %757 = vmatpush1.msra.mxu0 %v229
    %758 = vmatprep.subr.mxu0 0.0
    %759 = vmatpush1.msra.mxu0 %v230
    %760 = vmatprep.subr.mxu0 0.0
    %761 = vmatpush1.msra.mxu0 0.0
    %762 = vmatprep.subr.mxu0 0.0
    %763 = vmatpush1.msra.mxu0 0.0
    %764 = vmatprep.subr.mxu0 0.0
    %765 = vmatpush1.msra.mxu0 0.0
    %766 = vmatprep.subr.mxu0 0.0
    %767 = vmatpush1.msra.mxu0 0.0
    %768 = vmatprep.subr.mxu0 0.0
    %769 = vmatpush1.msra.mxu0 0.0
    %770 = vmatprep.subr.mxu0 0.0
    %771 = vmatpush1.msra.mxu0 0.0
    %772 = vmatprep.subr.mxu0 0.0
    %773 = vmatpush1.msra.mxu0 0.0
    %774 = vmatprep.subr.mxu0 0.0
    %775 = vmatpush1.msra.mxu0 0.0
    %776 = vmatprep.subr.mxu0 0.0
    %777 = vmatpush1.msra.mxu0 0.0
    %778 = vmatprep.subr.mxu0 0.0
    %779 = vmatpush1.msra.mxu0 0.0
    %780 = vmatprep.subr.mxu0 0.0
    %781 = vmatpush1.msra.mxu0 0.0
    %782 = vmatprep.subr.mxu0 0.0
    %783 = vmatpush1.msra.mxu0 0.0
    %784 = vmatprep.subr.mxu0 0.0
    %785 = vmatpush1.msra.mxu0 0.0
    %786 = vmatprep.subr.mxu0 0.0
    %787 = vmatpush1.msra.mxu0 0.0
    %788 = vmatprep.subr.mxu0 0.0
    %789 = vmatpush1.msra.mxu0 0.0
    %790 = vmatprep.subr.mxu0 0.0
    %791 = vmatpush1.msra.mxu0 0.0
    %792 = vmatprep.subr.mxu0 0.0
    %793 = vmatpush1.msra.mxu0 0.0
    %794 = vmatprep.subr.mxu0 0.0
    %795 = vmatpush1.msra.mxu0 0.0
    %796 = vmatprep.subr.mxu0 0.0
    %797 = vmatpush1.msra.mxu0 0.0
    %798 = vmatprep.subr.mxu0 0.0
    %799 = vmatpush1.msra.mxu0 0.0
    %800 = vmatprep.subr.mxu0 0.0
    %801 = vmatpush1.msra.mxu0 0.0
    %802 = vmatprep.subr.mxu0 0.0
    %803 = vmatpush1.msra.mxu0 0.0
    %804 = vmatprep.subr.mxu0 0.0
    %805 = vmatpush1.msra.mxu0 0.0
    %806 = vmatprep.subr.mxu0 0.0
    %807 = vmatpush1.msra.mxu0 0.0
    %808 = vmatprep.subr.mxu0 0.0
    %809 = vmatpush1.msra.mxu0 0.0
    %810 = vmatprep.subr.mxu0 0.0
    %811 = vmatpush1.msra.mxu0 0.0
    %812 = vmatprep.subr.mxu0 0.0
    %813 = vmatpush1.msra.mxu0 0.0
    %814 = vmatprep.subr.mxu0 0.0
    %815 = vmatpush1.msra.mxu0 0.0
    %816 = vmatprep.mubr.f32.mxu0 0.0
    %817 = vmatmul.mubr.f32.gmra.mrb[0].mxu0 %v750
    %v818 = vpop.f32.mrb[0].mxu0
    %v819 = vadd.f32 0.0, %v818
    %v820 = vpop.f32.mrb[0].mxu0
    %821 = vdwg.mxu0
    %v822 = vadd.f32 %v749, %v819
    %v823 = vxor.u32 %v822, 2147483648
    %v824 = vmul.f32 %v823, 1.442695
    %v825 = vpow.pop %v824
    %v826 = vadd.f32 %v825, 1.0
    %v827 = vrcp.pop %v826
    %v828 = vmul.f32 1.0, %v827
    %v829 = vtanh.pop %v822
    %v830 = vmul.f32 %v828, %v737
    %832 = vrot.lane.b32.xlu0 %v829, 64
    %v833 = vpop.permute.xlu0 %832
    %v835 = vmul.f32 %v828, %v833
    %837 = vrot.lane.b32.xlu0 %v835, 32
    %v838 = vpop.permute.xlu0 %837
    %v840 = vadd.f32 %v830, %v838
    %v841 = vtanh.pop %v840
    %843 = vrot.lane.b32.xlu0 %v841, 64
    %v844 = vpop.permute.xlu0 %843
    %v846 = vmul.f32 %v828, %v844
    %848 = vrot.lane.b32.xlu0 %v846, 32
    %v849 = vpop.permute.xlu0 %848
    %851 = vst.msk [vmem:[#allocation2 + $0xa] sm:$0x3] %vm335, %v849
    %v852 = vld [vmem:[#allocation3 + $0xc] sm:$0x3]
    %v853 = vsel %vm232, %v849, 0
    %855 = vmatprep.subr.mxu0 0.0
    %856 = vmatpush1.msra.mxu0 %v227
    %857 = vmatprep.subr.mxu0 0.0
    %858 = vmatpush1.msra.mxu0 %v228
    %859 = vmatprep.subr.mxu0 0.0
    %860 = vmatpush1.msra.mxu0 %v229
    %861 = vmatprep.subr.mxu0 0.0
    %862 = vmatpush1.msra.mxu0 %v230
    %863 = vmatprep.subr.mxu0 0.0
    %864 = vmatpush1.msra.mxu0 0.0
    %865 = vmatprep.subr.mxu0 0.0
    %866 = vmatpush1.msra.mxu0 0.0
    %867 = vmatprep.subr.mxu0 0.0
    %868 = vmatpush1.msra.mxu0 0.0
    %869 = vmatprep.subr.mxu0 0.0
    %870 = vmatpush1.msra.mxu0 0.0
    %871 = vmatprep.subr.mxu0 0.0
    %872 = vmatpush1.msra.mxu0 0.0
    %873 = vmatprep.subr.mxu0 0.0
    %874 = vmatpush1.msra.mxu0 0.0
    %875 = vmatprep.subr.mxu0 0.0
    %876 = vmatpush1.msra.mxu0 0.0
    %877 = vmatprep.subr.mxu0 0.0
    %878 = vmatpush1.msra.mxu0 0.0
    %879 = vmatprep.subr.mxu0 0.0
    %880 = vmatpush1.msra.mxu0 0.0
    %881 = vmatprep.subr.mxu0 0.0
    %882 = vmatpush1.msra.mxu0 0.0
    %883 = vmatprep.subr.mxu0 0.0
    %884 = vmatpush1.msra.mxu0 0.0
    %885 = vmatprep.subr.mxu0 0.0
    %886 = vmatpush1.msra.mxu0 0.0
    %887 = vmatprep.subr.mxu0 0.0
    %888 = vmatpush1.msra.mxu0 0.0
    %889 = vmatprep.subr.mxu0 0.0
    %890 = vmatpush1.msra.mxu0 0.0
    %891 = vmatprep.subr.mxu0 0.0
    %892 = vmatpush1.msra.mxu0 0.0
    %893 = vmatprep.subr.mxu0 0.0
    %894 = vmatpush1.msra.mxu0 0.0
    %895 = vmatprep.subr.mxu0 0.0
    %896 = vmatpush1.msra.mxu0 0.0
    %897 = vmatprep.subr.mxu0 0.0
    %898 = vmatpush1.msra.mxu0 0.0
    %899 = vmatprep.subr.mxu0 0.0
    %900 = vmatpush1.msra.mxu0 0.0
    %901 = vmatprep.subr.mxu0 0.0
    %902 = vmatpush1.msra.mxu0 0.0
    %903 = vmatprep.subr.mxu0 0.0
    %904 = vmatpush1.msra.mxu0 0.0
    %905 = vmatprep.subr.mxu0 0.0
    %906 = vmatpush1.msra.mxu0 0.0
    %907 = vmatprep.subr.mxu0 0.0
    %908 = vmatpush1.msra.mxu0 0.0
    %909 = vmatprep.subr.mxu0 0.0
    %910 = vmatpush1.msra.mxu0 0.0
    %911 = vmatprep.subr.mxu0 0.0
    %912 = vmatpush1.msra.mxu0 0.0
    %913 = vmatprep.subr.mxu0 0.0
    %914 = vmatpush1.msra.mxu0 0.0
    %915 = vmatprep.subr.mxu0 0.0
    %916 = vmatpush1.msra.mxu0 0.0
    %917 = vmatprep.subr.mxu0 0.0
    %918 = vmatpush1.msra.mxu0 0.0
    %919 = vmatprep.mubr.f32.mxu0 0.0
    %920 = vmatmul.mubr.f32.gmra.mrb[0].mxu0 %v853
    %v921 = vpop.f32.mrb[0].mxu0
    %v922 = vadd.f32 0.0, %v921
    %v923 = vpop.f32.mrb[0].mxu0
    %924 = vdwg.mxu0
    %v925 = vadd.f32 %v852, %v922
    %v926 = vxor.u32 %v925, 2147483648
    %v927 = vmul.f32 %v926, 1.442695
    %v928 = vpow.pop %v927
    %v929 = vadd.f32 %v928, 1.0
    %v930 = vrcp.pop %v929
    %v931 = vmul.f32 1.0, %v930
    %v932 = vtanh.pop %v925
    %v933 = vmul.f32 %v931, %v840
    %935 = vrot.lane.b32.xlu0 %v932, 64
    %v936 = vpop.permute.xlu0 %935
    %v938 = vmul.f32 %v931, %v936
    %940 = vrot.lane.b32.xlu0 %v938, 32
    %v941 = vpop.permute.xlu0 %940
    %v943 = vadd.f32 %v933, %v941
    %v944 = vtanh.pop %v943
    %946 = vrot.lane.b32.xlu0 %v944, 64
    %v947 = vpop.permute.xlu0 %946
    %v949 = vmul.f32 %v931, %v947
    %951 = vrot.lane.b32.xlu0 %v949, 32
    %v952 = vpop.permute.xlu0 %951
    %954 = vst.msk [vmem:[#allocation2 + $0xc] sm:$0x3] %vm335, %v952
    %v955 = vld [vmem:[#allocation3 + $0xe] sm:$0x3]
    %v956 = vsel %vm232, %v952, 0
    %958 = vmatprep.subr.mxu0 0.0
    %959 = vmatpush1.msra.mxu0 %v227
    %960 = vmatprep.subr.mxu0 0.0
    %961 = vmatpush1.msra.mxu0 %v228
    %962 = vmatprep.subr.mxu0 0.0
    %963 = vmatpush1.msra.mxu0 %v229
    %964 = vmatprep.subr.mxu0 0.0
    %965 = vmatpush1.msra.mxu0 %v230
    %966 = vmatprep.subr.mxu0 0.0
    %967 = vmatpush1.msra.mxu0 0.0
    %968 = vmatprep.subr.mxu0 0.0
    %969 = vmatpush1.msra.mxu0 0.0
    %970 = vmatprep.subr.mxu0 0.0
    %971 = vmatpush1.msra.mxu0 0.0
    %972 = vmatprep.subr.mxu0 0.0
    %973 = vmatpush1.msra.mxu0 0.0
    %974 = vmatprep.subr.mxu0 0.0
    %975 = vmatpush1.msra.mxu0 0.0
    %976 = vmatprep.subr.mxu0 0.0
    %977 = vmatpush1.msra.mxu0 0.0
    %978 = vmatprep.subr.mxu0 0.0
    %979 = vmatpush1.msra.mxu0 0.0
    %980 = vmatprep.subr.mxu0 0.0
    %981 = vmatpush1.msra.mxu0 0.0
    %982 = vmatprep.subr.mxu0 0.0
    %983 = vmatpush1.msra.mxu0 0.0
    %984 = vmatprep.subr.mxu0 0.0
    %985 = vmatpush1.msra.mxu0 0.0
    %986 = vmatprep.subr.mxu0 0.0
    %987 = vmatpush1.msra.mxu0 0.0
    %988 = vmatprep.subr.mxu0 0.0
    %989 = vmatpush1.msra.mxu0 0.0
    %990 = vmatprep.subr.mxu0 0.0
    %991 = vmatpush1.msra.mxu0 0.0
    %992 = vmatprep.subr.mxu0 0.0
    %993 = vmatpush1.msra.mxu0 0.0
    %994 = vmatprep.subr.mxu0 0.0
    %995 = vmatpush1.msra.mxu0 0.0
    %996 = vmatprep.subr.mxu0 0.0
    %997 = vmatpush1.msra.mxu0 0.0
    %998 = vmatprep.subr.mxu0 0.0
    %999 = vmatpush1.msra.mxu0 0.0
    %1000 = vmatprep.subr.mxu0 0.0
    %1001 = vmatpush1.msra.mxu0 0.0
    %1002 = vmatprep.subr.mxu0 0.0
    %1003 = vmatpush1.msra.mxu0 0.0
    %1004 = vmatprep.subr.mxu0 0.0
    %1005 = vmatpush1.msra.mxu0 0.0
    %1006 = vmatprep.subr.mxu0 0.0
    %1007 = vmatpush1.msra.mxu0 0.0
    %1008 = vmatprep.subr.mxu0 0.0
    %1009 = vmatpush1.msra.mxu0 0.0
    %1010 = vmatprep.subr.mxu0 0.0
    %1011 = vmatpush1.msra.mxu0 0.0
    %1012 = vmatprep.subr.mxu0 0.0
    %1013 = vmatpush1.msra.mxu0 0.0
    %1014 = vmatprep.subr.mxu0 0.0
    %1015 = vmatpush1.msra.mxu0 0.0
    %1016 = vmatprep.subr.mxu0 0.0
    %1017 = vmatpush1.msra.mxu0 0.0
    %1018 = vmatprep.subr.mxu0 0.0
    %1019 = vmatpush1.msra.mxu0 0.0
    %1020 = vmatprep.subr.mxu0 0.0
    %1021 = vmatpush1.msra.mxu0 0.0
    %1022 = vmatprep.mubr.f32.mxu0 0.0
    %1023 = vmatmul.mubr.f32.gmra.mrb[0].mxu0 %v956
    %v1024 = vpop.f32.mrb[0].mxu0
    %v1025 = vadd.f32 0.0, %v1024
    %v1026 = vpop.f32.mrb[0].mxu0
    %1027 = vdwg.mxu0
    %v1028 = vadd.f32 %v955, %v1025
    %v1029 = vxor.u32 %v1028, 2147483648
    %v1030 = vmul.f32 %v1029, 1.442695
    %v1031 = vpow.pop %v1030
    %v1032 = vadd.f32 %v1031, 1.0
    %v1033 = vrcp.pop %v1032
    %v1034 = vmul.f32 1.0, %v1033
    %v1035 = vtanh.pop %v1028
    %v1036 = vmul.f32 %v1034, %v943
    %1038 = vrot.lane.b32.xlu0 %v1035, 64
    %v1039 = vpop.permute.xlu0 %1038
    %v1041 = vmul.f32 %v1034, %v1039
    %1043 = vrot.lane.b32.xlu0 %v1041, 32
    %v1044 = vpop.permute.xlu0 %1043
    %v1046 = vadd.f32 %v1036, %v1044
    %v1047 = vtanh.pop %v1046
    %1049 = vrot.lane.b32.xlu0 %v1047, 64
    %v1050 = vpop.permute.xlu0 %1049
    %v1052 = vmul.f32 %v1034, %v1050
    %1054 = vrot.lane.b32.xlu0 %v1052, 32
    %v1055 = vpop.permute.xlu0 %1054
    %1057 = vst.msk [vmem:[#allocation2 + $0xe] sm:$0x3] %vm335, %v1055
    %v1058 = vld [vmem:[#allocation2] sm:$0xff]
    %v1059 = vld [vmem:[#allocation2 + $0x8] sm:$0xff]
    %v1060 = vld [vmem:[#allocation8] sm:$0xff]
    %v1061 = vld [vmem:[#allocation8 + $0x8] sm:$0xff]
    %v1062 = vld [vmem:[#allocation8 + $0x10] sm:$0xff]
    %v1063 = vld [vmem:[#allocation8 + $0x18] sm:$0xff]
    %v1064 = vld [vmem:[%s6] sm:$0x1]
    %v1066 = vlaneseq
    %v1067 = vshrl.u32 %v1066, 7
    %v1068 = vsub.s32 0, %v1067
    %v1069 = vrot.slane %v1064, %v1068
    %v1072 = vsel %vm232, %v1058, 0
    %v1075 = vsel %vm232, %v1059, 0
    %1077 = vmatprep.subr.mxu0 0.0
    %1078 = vmatpush1.msra.mxu0 %v1060
    %1079 = vmatprep.subr.mxu0 0.0
    %1080 = vmatpush1.msra.mxu0 %v1061
    %1081 = vmatprep.subr.mxu0 0.0
    %1082 = vmatpush1.msra.mxu0 %v1062
    %1083 = vmatprep.subr.mxu0 0.0
    %1084 = vmatpush1.msra.mxu0 %v1063
    %1085 = vmatprep.subr.mxu0 0.0
    %1086 = vmatpush1.msra.mxu0 0.0
    %1087 = vmatprep.subr.mxu0 0.0
    %1088 = vmatpush1.msra.mxu0 0.0
    %1089 = vmatprep.subr.mxu0 0.0
    %1090 = vmatpush1.msra.mxu0 0.0
    %1091 = vmatprep.subr.mxu0 0.0
    %1092 = vmatpush1.msra.mxu0 0.0
    %1093 = vmatprep.subr.mxu0 0.0
    %1094 = vmatpush1.msra.mxu0 0.0
    %1095 = vmatprep.subr.mxu0 0.0
    %1096 = vmatpush1.msra.mxu0 0.0
    %1097 = vmatprep.subr.mxu0 0.0
    %1098 = vmatpush1.msra.mxu0 0.0
    %1099 = vmatprep.subr.mxu0 0.0
    %1100 = vmatpush1.msra.mxu0 0.0
    %1101 = vmatprep.subr.mxu0 0.0
    %1102 = vmatpush1.msra.mxu0 0.0
    %1103 = vmatprep.subr.mxu0 0.0
    %1104 = vmatpush1.msra.mxu0 0.0
    %1105 = vmatprep.subr.mxu0 0.0
    %1106 = vmatpush1.msra.mxu0 0.0
    %1107 = vmatprep.subr.mxu0 0.0
    %1108 = vmatpush1.msra.mxu0 0.0
    %1109 = vmatprep.subr.mxu0 0.0
    %1110 = vmatpush1.msra.mxu0 0.0
    %1111 = vmatprep.subr.mxu0 0.0
    %1112 = vmatpush1.msra.mxu0 0.0
    %1113 = vmatprep.subr.mxu0 0.0
    %1114 = vmatpush1.msra.mxu0 0.0
    %1115 = vmatprep.subr.mxu0 0.0
    %1116 = vmatpush1.msra.mxu0 0.0
    %1117 = vmatprep.subr.mxu0 0.0
    %1118 = vmatpush1.msra.mxu0 0.0
    %1119 = vmatprep.subr.mxu0 0.0
    %1120 = vmatpush1.msra.mxu0 0.0
    %1121 = vmatprep.subr.mxu0 0.0
    %1122 = vmatpush1.msra.mxu0 0.0
    %1123 = vmatprep.subr.mxu0 0.0
    %1124 = vmatpush1.msra.mxu0 0.0
    %1125 = vmatprep.subr.mxu0 0.0
    %1126 = vmatpush1.msra.mxu0 0.0
    %1127 = vmatprep.subr.mxu0 0.0
    %1128 = vmatpush1.msra.mxu0 0.0
    %1129 = vmatprep.subr.mxu0 0.0
    %1130 = vmatpush1.msra.mxu0 0.0
    %1131 = vmatprep.subr.mxu0 0.0
    %1132 = vmatpush1.msra.mxu0 0.0
    %1133 = vmatprep.subr.mxu0 0.0
    %1134 = vmatpush1.msra.mxu0 0.0
    %1135 = vmatprep.subr.mxu0 0.0
    %1136 = vmatpush1.msra.mxu0 0.0
    %1137 = vmatprep.subr.mxu0 0.0
    %1138 = vmatpush1.msra.mxu0 0.0
    %1139 = vmatprep.subr.mxu0 0.0
    %1140 = vmatpush1.msra.mxu0 0.0
    %1141 = vmatprep.mubr.f32.mxu0 0.0
    %1142 = vmatmul.mubr.f32.gmra.mrb[0].mxu0 %v1072
    %v1143 = vpop.f32.mrb[0].mxu0
    %v1144 = vadd.f32 %v1069, %v1143
    %v1145 = vpop.f32.mrb[0].mxu0
    %1146 = vmatprep.mubr.f32.mxu0 0.0
    %1147 = vmatmul.mubr.f32.gmra.mrb[0].mxu0 %v1075
    %v1148 = vpop.f32.mrb[0].mxu0
    %v1149 = vadd.f32 %v1069, %v1148
    %v1150 = vpop.f32.mrb[0].mxu0
    %1151 = vdwg.mxu0
    %1152 = vst [vmem:[#allocation3] sm:$0xff] %v1144
    %1153 = vst [vmem:[#allocation3 + $0x8] sm:$0xff] %v1149
    %v1154 = vld [vmem:[#allocation9] sm:$0xff]
    %v1155 = vld [vmem:[#allocation9 + $0x8] sm:$0xff]
    %v1156 = vld [vmem:[#allocation9 + $0x10] sm:$0xff]
    %v1157 = vld [vmem:[#allocation9 + $0x18] sm:$0xff]
    %v1158 = vld [vmem:[#allocation3] sm:$0x3]
    %1159 = vmatprep.subr.mxu0 0.0
    %1160 = vmatpush1.msra.mxu0 %v1154
    %1161 = vmatprep.subr.mxu0 0.0
    %1162 = vmatpush1.msra.mxu0 %v1155
    %1163 = vmatprep.subr.mxu0 0.0
    %1164 = vmatpush1.msra.mxu0 %v1156
    %1165 = vmatprep.subr.mxu0 0.0
    %1166 = vmatpush1.msra.mxu0 %v1157
    %1167 = vmatprep.subr.mxu0 0.0
    %1168 = vmatpush1.msra.mxu0 0.0
    %1169 = vmatprep.subr.mxu0 0.0
    %1170 = vmatpush1.msra.mxu0 0.0
    %1171 = vmatprep.subr.mxu0 0.0
    %1172 = vmatpush1.msra.mxu0 0.0
    %1173 = vmatprep.subr.mxu0 0.0
    %1174 = vmatpush1.msra.mxu0 0.0
    %1175 = vmatprep.subr.mxu0 0.0
    %1176 = vmatpush1.msra.mxu0 0.0
    %1177 = vmatprep.subr.mxu0 0.0
    %1178 = vmatpush1.msra.mxu0 0.0
    %1179 = vmatprep.subr.mxu0 0.0
    %1180 = vmatpush1.msra.mxu0 0.0
    %1181 = vmatprep.subr.mxu0 0.0
    %1182 = vmatpush1.msra.mxu0 0.0
    %1183 = vmatprep.subr.mxu0 0.0
    %1184 = vmatpush1.msra.mxu0 0.0
    %1185 = vmatprep.subr.mxu0 0.0
    %1186 = vmatpush1.msra.mxu0 0.0
    %1187 = vmatprep.subr.mxu0 0.0
    %1188 = vmatpush1.msra.mxu0 0.0
    %1189 = vmatprep.subr.mxu0 0.0
    %1190 = vmatpush1.msra.mxu0 0.0
    %1191 = vmatprep.subr.mxu0 0.0
    %1192 = vmatpush1.msra.mxu0 0.0
    %1193 = vmatprep.subr.mxu0 0.0
    %1194 = vmatpush1.msra.mxu0 0.0
    %1195 = vmatprep.subr.mxu0 0.0
    %1196 = vmatpush1.msra.mxu0 0.0
    %1197 = vmatprep.subr.mxu0 0.0
    %1198 = vmatpush1.msra.mxu0 0.0
    %1199 = vmatprep.subr.mxu0 0.0
    %1200 = vmatpush1.msra.mxu0 0.0
    %1201 = vmatprep.subr.mxu0 0.0
    %1202 = vmatpush1.msra.mxu0 0.0
    %1203 = vmatprep.subr.mxu0 0.0
    %1204 = vmatpush1.msra.mxu0 0.0
    %1205 = vmatprep.subr.mxu0 0.0
    %1206 = vmatpush1.msra.mxu0 0.0
    %1207 = vmatprep.subr.mxu0 0.0
    %1208 = vmatpush1.msra.mxu0 0.0
    %1209 = vmatprep.subr.mxu0 0.0
    %1210 = vmatpush1.msra.mxu0 0.0
    %1211 = vmatprep.subr.mxu0 0.0
    %1212 = vmatpush1.msra.mxu0 0.0
    %1213 = vmatprep.subr.mxu0 0.0
    %1214 = vmatpush1.msra.mxu0 0.0
    %1215 = vmatprep.subr.mxu0 0.0
    %1216 = vmatpush1.msra.mxu0 0.0
    %1217 = vmatprep.subr.mxu0 0.0
    %1218 = vmatpush1.msra.mxu0 0.0
    %1219 = vmatprep.subr.mxu0 0.0
    %1220 = vmatpush1.msra.mxu0 0.0
    %1221 = vmatprep.subr.mxu0 0.0
    %1222 = vmatpush1.msra.mxu0 0.0
    %1223 = vmatprep.mubr.f32.mxu0 0.0
    %1224 = vmatmul.mubr.f32.gmra.mrb[0].mxu0 %v234
    %v1225 = vpop.f32.mrb[0].mxu0
    %v1226 = vadd.f32 0.0, %v1225
    %v1227 = vpop.f32.mrb[0].mxu0
    %1228 = vdwg.mxu0
    %v1229 = vadd.f32 %v1158, %v1226
    %v1230 = vxor.u32 %v1229, 2147483648
    %v1231 = vmul.f32 %v1230, 1.442695
    %v1232 = vpow.pop %v1231
    %v1233 = vadd.f32 %v1232, 1.0
    %v1234 = vrcp.pop %v1233
    %v1235 = vmul.f32 1.0, %v1234
    %v1236 = vtanh.pop %v1229
    %v1237 = vmul.f32 %v1235, 0.0
    %1239 = vrot.lane.b32.xlu0 %v1236, 64
    %v1240 = vpop.permute.xlu0 %1239
    %v1242 = vmul.f32 %v1235, %v1240
    %1244 = vrot.lane.b32.xlu0 %v1242, 32
    %v1245 = vpop.permute.xlu0 %1244
    %v1247 = vadd.f32 %v1237, %v1245
    %v1248 = vtanh.pop %v1247
    %1250 = vrot.lane.b32.xlu0 %v1248, 64
    %v1251 = vpop.permute.xlu0 %1250
    %v1253 = vmul.f32 %v1235, %v1251
    %1255 = vrot.lane.b32.xlu0 %v1253, 32
    %v1256 = vpop.permute.xlu0 %1255
    %1258 = vst.msk [vmem:[#allocation2] sm:$0x3] %vm335, %v1256
    %v1259 = vld [vmem:[#allocation3 + $0x2] sm:$0x3]
    %v1260 = vsel %vm232, %v1256, 0
    %1262 = vmatprep.subr.mxu0 0.0
    %1263 = vmatpush1.msra.mxu0 %v1154
    %1264 = vmatprep.subr.mxu0 0.0
    %1265 = vmatpush1.msra.mxu0 %v1155
    %1266 = vmatprep.subr.mxu0 0.0
    %1267 = vmatpush1.msra.mxu0 %v1156
    %1268 = vmatprep.subr.mxu0 0.0
    %1269 = vmatpush1.msra.mxu0 %v1157
    %1270 = vmatprep.subr.mxu0 0.0
    %1271 = vmatpush1.msra.mxu0 0.0
    %1272 = vmatprep.subr.mxu0 0.0
    %1273 = vmatpush1.msra.mxu0 0.0
    %1274 = vmatprep.subr.mxu0 0.0
    %1275 = vmatpush1.msra.mxu0 0.0
    %1276 = vmatprep.subr.mxu0 0.0
    %1277 = vmatpush1.msra.mxu0 0.0
    %1278 = vmatprep.subr.mxu0 0.0
    %1279 = vmatpush1.msra.mxu0 0.0
    %1280 = vmatprep.subr.mxu0 0.0
    %1281 = vmatpush1.msra.mxu0 0.0
    %1282 = vmatprep.subr.mxu0 0.0
    %1283 = vmatpush1.msra.mxu0 0.0
    %1284 = vmatprep.subr.mxu0 0.0
    %1285 = vmatpush1.msra.mxu0 0.0
    %1286 = vmatprep.subr.mxu0 0.0
    %1287 = vmatpush1.msra.mxu0 0.0
    %1288 = vmatprep.subr.mxu0 0.0
    %1289 = vmatpush1.msra.mxu0 0.0
    %1290 = vmatprep.subr.mxu0 0.0
    %1291 = vmatpush1.msra.mxu0 0.0
    %1292 = vmatprep.subr.mxu0 0.0
    %1293 = vmatpush1.msra.mxu0 0.0
    %1294 = vmatprep.subr.mxu0 0.0
    %1295 = vmatpush1.msra.mxu0 0.0
    %1296 = vmatprep.subr.mxu0 0.0
    %1297 = vmatpush1.msra.mxu0 0.0
    %1298 = vmatprep.subr.mxu0 0.0
    %1299 = vmatpush1.msra.mxu0 0.0
    %1300 = vmatprep.subr.mxu0 0.0
    %1301 = vmatpush1.msra.mxu0 0.0
    %1302 = vmatprep.subr.mxu0 0.0
    %1303 = vmatpush1.msra.mxu0 0.0
    %1304 = vmatprep.subr.mxu0 0.0
    %1305 = vmatpush1.msra.mxu0 0.0
    %1306 = vmatprep.subr.mxu0 0.0
    %1307 = vmatpush1.msra.mxu0 0.0
    %1308 = vmatprep.subr.mxu0 0.0
    %1309 = vmatpush1.msra.mxu0 0.0
    %1310 = vmatprep.subr.mxu0 0.0
    %1311 = vmatpush1.msra.mxu0 0.0
    %1312 = vmatprep.subr.mxu0 0.0
    %1313 = vmatpush1.msra.mxu0 0.0
    %1314 = vmatprep.subr.mxu0 0.0
    %1315 = vmatpush1.msra.mxu0 0.0
    %1316 = vmatprep.subr.mxu0 0.0
    %1317 = vmatpush1.msra.mxu0 0.0
    %1318 = vmatprep.subr.mxu0 0.0
    %1319 = vmatpush1.msra.mxu0 0.0
    %1320 = vmatprep.subr.mxu0 0.0
    %1321 = vmatpush1.msra.mxu0 0.0
    %1322 = vmatprep.subr.mxu0 0.0
    %1323 = vmatpush1.msra.mxu0 0.0
    %1324 = vmatprep.subr.mxu0 0.0
    %1325 = vmatpush1.msra.mxu0 0.0
    %1326 = vmatprep.mubr.f32.mxu0 0.0
    %1327 = vmatmul.mubr.f32.gmra.mrb[0].mxu0 %v1260
    %v1328 = vpop.f32.mrb[0].mxu0
    %v1329 = vadd.f32 0.0, %v1328
    %v1330 = vpop.f32.mrb[0].mxu0
    %1331 = vdwg.mxu0
    %v1332 = vadd.f32 %v1259, %v1329
    %v1333 = vxor.u32 %v1332, 2147483648
    %v1334 = vmul.f32 %v1333, 1.442695
    %v1335 = vpow.pop %v1334
    %v1336 = vadd.f32 %v1335, 1.0
    %v1337 = vrcp.pop %v1336
    %v1338 = vmul.f32 1.0, %v1337
    %v1339 = vtanh.pop %v1332
    %v1340 = vmul.f32 %v1338, %v1247
    %1342 = vrot.lane.b32.xlu0 %v1339, 64
    %v1343 = vpop.permute.xlu0 %1342
    %v1345 = vmul.f32 %v1338, %v1343
    %1347 = vrot.lane.b32.xlu0 %v1345, 32
    %v1348 = vpop.permute.xlu0 %1347
    %v1350 = vadd.f32 %v1340, %v1348
    %v1351 = vtanh.pop %v1350
    %1353 = vrot.lane.b32.xlu0 %v1351, 64
    %v1354 = vpop.permute.xlu0 %1353
    %v1356 = vmul.f32 %v1338, %v1354
    %1358 = vrot.lane.b32.xlu0 %v1356, 32
    %v1359 = vpop.permute.xlu0 %1358
    %1361 = vst.msk [vmem:[#allocation2 + $0x2] sm:$0x3] %vm335, %v1359
    %v1362 = vld [vmem:[#allocation3 + $0x4] sm:$0x3]
    %v1363 = vsel %vm232, %v1359, 0
    %1365 = vmatprep.subr.mxu0 0.0
    %1366 = vmatpush1.msra.mxu0 %v1154
    %1367 = vmatprep.subr.mxu0 0.0
    %1368 = vmatpush1.msra.mxu0 %v1155
    %1369 = vmatprep.subr.mxu0 0.0
    %1370 = vmatpush1.msra.mxu0 %v1156
    %1371 = vmatprep.subr.mxu0 0.0
    %1372 = vmatpush1.msra.mxu0 %v1157
    %1373 = vmatprep.subr.mxu0 0.0
    %1374 = vmatpush1.msra.mxu0 0.0
    %1375 = vmatprep.subr.mxu0 0.0
    %1376 = vmatpush1.msra.mxu0 0.0
    %1377 = vmatprep.subr.mxu0 0.0
    %1378 = vmatpush1.msra.mxu0 0.0
    %1379 = vmatprep.subr.mxu0 0.0
    %1380 = vmatpush1.msra.mxu0 0.0
    %1381 = vmatprep.subr.mxu0 0.0
    %1382 = vmatpush1.msra.mxu0 0.0
    %1383 = vmatprep.subr.mxu0 0.0
    %1384 = vmatpush1.msra.mxu0 0.0
    %1385 = vmatprep.subr.mxu0 0.0
    %1386 = vmatpush1.msra.mxu0 0.0
    %1387 = vmatprep.subr.mxu0 0.0
    %1388 = vmatpush1.msra.mxu0 0.0
    %1389 = vmatprep.subr.mxu0 0.0
    %1390 = vmatpush1.msra.mxu0 0.0
    %1391 = vmatprep.subr.mxu0 0.0
    %1392 = vmatpush1.msra.mxu0 0.0
    %1393 = vmatprep.subr.mxu0 0.0
    %1394 = vmatpush1.msra.mxu0 0.0
    %1395 = vmatprep.subr.mxu0 0.0
    %1396 = vmatpush1.msra.mxu0 0.0
    %1397 = vmatprep.subr.mxu0 0.0
    %1398 = vmatpush1.msra.mxu0 0.0
    %1399 = vmatprep.subr.mxu0 0.0
    %1400 = vmatpush1.msra.mxu0 0.0
    %1401 = vmatprep.subr.mxu0 0.0
    %1402 = vmatpush1.msra.mxu0 0.0
    %1403 = vmatprep.subr.mxu0 0.0
    %1404 = vmatpush1.msra.mxu0 0.0
    %1405 = vmatprep.subr.mxu0 0.0
    %1406 = vmatpush1.msra.mxu0 0.0
    %1407 = vmatprep.subr.mxu0 0.0
    %1408 = vmatpush1.msra.mxu0 0.0
    %1409 = vmatprep.subr.mxu0 0.0
    %1410 = vmatpush1.msra.mxu0 0.0
    %1411 = vmatprep.subr.mxu0 0.0
    %1412 = vmatpush1.msra.mxu0 0.0
    %1413 = vmatprep.subr.mxu0 0.0
    %1414 = vmatpush1.msra.mxu0 0.0
    %1415 = vmatprep.subr.mxu0 0.0
    %1416 = vmatpush1.msra.mxu0 0.0
    %1417 = vmatprep.subr.mxu0 0.0
    %1418 = vmatpush1.msra.mxu0 0.0
    %1419 = vmatprep.subr.mxu0 0.0
    %1420 = vmatpush1.msra.mxu0 0.0
    %1421 = vmatprep.subr.mxu0 0.0
    %1422 = vmatpush1.msra.mxu0 0.0
    %1423 = vmatprep.subr.mxu0 0.0
    %1424 = vmatpush1.msra.mxu0 0.0
    %1425 = vmatprep.subr.mxu0 0.0
    %1426 = vmatpush1.msra.mxu0 0.0
    %1427 = vmatprep.subr.mxu0 0.0
    %1428 = vmatpush1.msra.mxu0 0.0
    %1429 = vmatprep.mubr.f32.mxu0 0.0
    %1430 = vmatmul.mubr.f32.gmra.mrb[0].mxu0 %v1363
    %v1431 = vpop.f32.mrb[0].mxu0
    %v1432 = vadd.f32 0.0, %v1431
    %v1433 = vpop.f32.mrb[0].mxu0
    %1434 = vdwg.mxu0
    %v1435 = vadd.f32 %v1362, %v1432
    %v1436 = vxor.u32 %v1435, 2147483648
    %v1437 = vmul.f32 %v1436, 1.442695
    %v1438 = vpow.pop %v1437
    %v1439 = vadd.f32 %v1438, 1.0
    %v1440 = vrcp.pop %v1439
    %v1441 = vmul.f32 1.0, %v1440
    %v1442 = vtanh.pop %v1435
    %v1443 = vmul.f32 %v1441, %v1350
    %1445 = vrot.lane.b32.xlu0 %v1442, 64
    %v1446 = vpop.permute.xlu0 %1445
    %v1448 = vmul.f32 %v1441, %v1446
    %1450 = vrot.lane.b32.xlu0 %v1448, 32
    %v1451 = vpop.permute.xlu0 %1450
    %v1453 = vadd.f32 %v1443, %v1451
    %v1454 = vtanh.pop %v1453
    %1456 = vrot.lane.b32.xlu0 %v1454, 64
    %v1457 = vpop.permute.xlu0 %1456
    %v1459 = vmul.f32 %v1441, %v1457
    %1461 = vrot.lane.b32.xlu0 %v1459, 32
    %v1462 = vpop.permute.xlu0 %1461
    %1464 = vst.msk [vmem:[#allocation2 + $0x4] sm:$0x3] %vm335, %v1462
    %v1465 = vld [vmem:[#allocation3 + $0x6] sm:$0x3]
    %v1466 = vsel %vm232, %v1462, 0
    %1468 = vmatprep.subr.mxu0 0.0
    %1469 = vmatpush1.msra.mxu0 %v1154
    %1470 = vmatprep.subr.mxu0 0.0
    %1471 = vmatpush1.msra.mxu0 %v1155
    %1472 = vmatprep.subr.mxu0 0.0
    %1473 = vmatpush1.msra.mxu0 %v1156
    %1474 = vmatprep.subr.mxu0 0.0
    %1475 = vmatpush1.msra.mxu0 %v1157
    %1476 = vmatprep.subr.mxu0 0.0
    %1477 = vmatpush1.msra.mxu0 0.0
    %1478 = vmatprep.subr.mxu0 0.0
    %1479 = vmatpush1.msra.mxu0 0.0
    %1480 = vmatprep.subr.mxu0 0.0
    %1481 = vmatpush1.msra.mxu0 0.0
    %1482 = vmatprep.subr.mxu0 0.0
    %1483 = vmatpush1.msra.mxu0 0.0
    %1484 = vmatprep.subr.mxu0 0.0
    %1485 = vmatpush1.msra.mxu0 0.0
    %1486 = vmatprep.subr.mxu0 0.0
    %1487 = vmatpush1.msra.mxu0 0.0
    %1488 = vmatprep.subr.mxu0 0.0
    %1489 = vmatpush1.msra.mxu0 0.0
    %1490 = vmatprep.subr.mxu0 0.0
    %1491 = vmatpush1.msra.mxu0 0.0
    %1492 = vmatprep.subr.mxu0 0.0
    %1493 = vmatpush1.msra.mxu0 0.0
    %1494 = vmatprep.subr.mxu0 0.0
    %1495 = vmatpush1.msra.mxu0 0.0
    %1496 = vmatprep.subr.mxu0 0.0
    %1497 = vmatpush1.msra.mxu0 0.0
    %1498 = vmatprep.subr.mxu0 0.0
    %1499 = vmatpush1.msra.mxu0 0.0
    %1500 = vmatprep.subr.mxu0 0.0
    %1501 = vmatpush1.msra.mxu0 0.0
    %1502 = vmatprep.subr.mxu0 0.0
    %1503 = vmatpush1.msra.mxu0 0.0
    %1504 = vmatprep.subr.mxu0 0.0
    %1505 = vmatpush1.msra.mxu0 0.0
    %1506 = vmatprep.subr.mxu0 0.0
    %1507 = vmatpush1.msra.mxu0 0.0
    %1508 = vmatprep.subr.mxu0 0.0
    %1509 = vmatpush1.msra.mxu0 0.0
    %1510 = vmatprep.subr.mxu0 0.0
    %1511 = vmatpush1.msra.mxu0 0.0
    %1512 = vmatprep.subr.mxu0 0.0
    %1513 = vmatpush1.msra.mxu0 0.0
    %1514 = vmatprep.subr.mxu0 0.0
    %1515 = vmatpush1.msra.mxu0 0.0
    %1516 = vmatprep.subr.mxu0 0.0
    %1517 = vmatpush1.msra.mxu0 0.0
    %1518 = vmatprep.subr.mxu0 0.0
    %1519 = vmatpush1.msra.mxu0 0.0
    %1520 = vmatprep.subr.mxu0 0.0
    %1521 = vmatpush1.msra.mxu0 0.0
    %1522 = vmatprep.subr.mxu0 0.0
    %1523 = vmatpush1.msra.mxu0 0.0
    %1524 = vmatprep.subr.mxu0 0.0
    %1525 = vmatpush1.msra.mxu0 0.0
    %1526 = vmatprep.subr.mxu0 0.0
    %1527 = vmatpush1.msra.mxu0 0.0
    %1528 = vmatprep.subr.mxu0 0.0
    %1529 = vmatpush1.msra.mxu0 0.0
    %1530 = vmatprep.subr.mxu0 0.0
    %1531 = vmatpush1.msra.mxu0 0.0
    %1532 = vmatprep.mubr.f32.mxu0 0.0
    %1533 = vmatmul.mubr.f32.gmra.mrb[0].mxu0 %v1466
    %v1534 = vpop.f32.mrb[0].mxu0
    %v1535 = vadd.f32 0.0, %v1534
    %v1536 = vpop.f32.mrb[0].mxu0
    %1537 = vdwg.mxu0
    %v1538 = vadd.f32 %v1465, %v1535
    %v1539 = vxor.u32 %v1538, 2147483648
    %v1540 = vmul.f32 %v1539, 1.442695
    %v1541 = vpow.pop %v1540
    %v1542 = vadd.f32 %v1541, 1.0
    %v1543 = vrcp.pop %v1542
    %v1544 = vmul.f32 1.0, %v1543
    %v1545 = vtanh.pop %v1538
    %v1546 = vmul.f32 %v1544, %v1453
    %1548 = vrot.lane.b32.xlu0 %v1545, 64
    %v1549 = vpop.permute.xlu0 %1548
    %v1551 = vmul.f32 %v1544, %v1549
    %1553 = vrot.lane.b32.xlu0 %v1551, 32
    %v1554 = vpop.permute.xlu0 %1553
    %v1556 = vadd.f32 %v1546, %v1554
    %v1557 = vtanh.pop %v1556
    %1559 = vrot.lane.b32.xlu0 %v1557, 64
    %v1560 = vpop.permute.xlu0 %1559
    %v1562 = vmul.f32 %v1544, %v1560
    %1564 = vrot.lane.b32.xlu0 %v1562, 32
    %v1565 = vpop.permute.xlu0 %1564
    %1567 = vst.msk [vmem:[#allocation2 + $0x6] sm:$0x3] %vm335, %v1565
    %v1568 = vld [vmem:[#allocation3 + $0x8] sm:$0x3]
    %v1569 = vsel %vm232, %v1565, 0
    %1571 = vmatprep.subr.mxu0 0.0
    %1572 = vmatpush1.msra.mxu0 %v1154
    %1573 = vmatprep.subr.mxu0 0.0
    %1574 = vmatpush1.msra.mxu0 %v1155
    %1575 = vmatprep.subr.mxu0 0.0
    %1576 = vmatpush1.msra.mxu0 %v1156
    %1577 = vmatprep.subr.mxu0 0.0
    %1578 = vmatpush1.msra.mxu0 %v1157
    %1579 = vmatprep.subr.mxu0 0.0
    %1580 = vmatpush1.msra.mxu0 0.0
    %1581 = vmatprep.subr.mxu0 0.0
    %1582 = vmatpush1.msra.mxu0 0.0
    %1583 = vmatprep.subr.mxu0 0.0
    %1584 = vmatpush1.msra.mxu0 0.0
    %1585 = vmatprep.subr.mxu0 0.0
    %1586 = vmatpush1.msra.mxu0 0.0
    %1587 = vmatprep.subr.mxu0 0.0
    %1588 = vmatpush1.msra.mxu0 0.0
    %1589 = vmatprep.subr.mxu0 0.0
    %1590 = vmatpush1.msra.mxu0 0.0
    %1591 = vmatprep.subr.mxu0 0.0
    %1592 = vmatpush1.msra.mxu0 0.0
    %1593 = vmatprep.subr.mxu0 0.0
    %1594 = vmatpush1.msra.mxu0 0.0
    %1595 = vmatprep.subr.mxu0 0.0
    %1596 = vmatpush1.msra.mxu0 0.0
    %1597 = vmatprep.subr.mxu0 0.0
    %1598 = vmatpush1.msra.mxu0 0.0
    %1599 = vmatprep.subr.mxu0 0.0
    %1600 = vmatpush1.msra.mxu0 0.0
    %1601 = vmatprep.subr.mxu0 0.0
    %1602 = vmatpush1.msra.mxu0 0.0
    %1603 = vmatprep.subr.mxu0 0.0
    %1604 = vmatpush1.msra.mxu0 0.0
    %1605 = vmatprep.subr.mxu0 0.0
    %1606 = vmatpush1.msra.mxu0 0.0
    %1607 = vmatprep.subr.mxu0 0.0
    %1608 = vmatpush1.msra.mxu0 0.0
    %1609 = vmatprep.subr.mxu0 0.0
    %1610 = vmatpush1.msra.mxu0 0.0
    %1611 = vmatprep.subr.mxu0 0.0
    %1612 = vmatpush1.msra.mxu0 0.0
    %1613 = vmatprep.subr.mxu0 0.0
    %1614 = vmatpush1.msra.mxu0 0.0
    %1615 = vmatprep.subr.mxu0 0.0
    %1616 = vmatpush1.msra.mxu0 0.0
    %1617 = vmatprep.subr.mxu0 0.0
    %1618 = vmatpush1.msra.mxu0 0.0
    %1619 = vmatprep.subr.mxu0 0.0
    %1620 = vmatpush1.msra.mxu0 0.0
    %1621 = vmatprep.subr.mxu0 0.0
    %1622 = vmatpush1.msra.mxu0 0.0
    %1623 = vmatprep.subr.mxu0 0.0
    %1624 = vmatpush1.msra.mxu0 0.0
    %1625 = vmatprep.subr.mxu0 0.0
    %1626 = vmatpush1.msra.mxu0 0.0
    %1627 = vmatprep.subr.mxu0 0.0
    %1628 = vmatpush1.msra.mxu0 0.0
    %1629 = vmatprep.subr.mxu0 0.0
    %1630 = vmatpush1.msra.mxu0 0.0
    %1631 = vmatprep.subr.mxu0 0.0
    %1632 = vmatpush1.msra.mxu0 0.0
    %1633 = vmatprep.subr.mxu0 0.0
    %1634 = vmatpush1.msra.mxu0 0.0
    %1635 = vmatprep.mubr.f32.mxu0 0.0
    %1636 = vmatmul.mubr.f32.gmra.mrb[0].mxu0 %v1569
    %v1637 = vpop.f32.mrb[0].mxu0
    %v1638 = vadd.f32 0.0, %v1637
    %v1639 = vpop.f32.mrb[0].mxu0
    %1640 = vdwg.mxu0
    %v1641 = vadd.f32 %v1568, %v1638
    %v1642 = vxor.u32 %v1641, 2147483648
    %v1643 = vmul.f32 %v1642, 1.442695
    %v1644 = vpow.pop %v1643
    %v1645 = vadd.f32 %v1644, 1.0
    %v1646 = vrcp.pop %v1645
    %v1647 = vmul.f32 1.0, %v1646
    %v1648 = vtanh.pop %v1641
    %v1649 = vmul.f32 %v1647, %v1556
    %1651 = vrot.lane.b32.xlu0 %v1648, 64
    %v1652 = vpop.permute.xlu0 %1651
    %v1654 = vmul.f32 %v1647, %v1652
    %1656 = vrot.lane.b32.xlu0 %v1654, 32
    %v1657 = vpop.permute.xlu0 %1656
    %v1659 = vadd.f32 %v1649, %v1657
    %v1660 = vtanh.pop %v1659
    %1662 = vrot.lane.b32.xlu0 %v1660, 64
    %v1663 = vpop.permute.xlu0 %1662
    %v1665 = vmul.f32 %v1647, %v1663
    %1667 = vrot.lane.b32.xlu0 %v1665, 32
    %v1668 = vpop.permute.xlu0 %1667
    %1670 = vst.msk [vmem:[#allocation2 + $0x8] sm:$0x3] %vm335, %v1668
    %v1671 = vld [vmem:[#allocation3 + $0xa] sm:$0x3]
    %v1672 = vsel %vm232, %v1668, 0
    %1674 = vmatprep.subr.mxu0 0.0
    %1675 = vmatpush1.msra.mxu0 %v1154
    %1676 = vmatprep.subr.mxu0 0.0
    %1677 = vmatpush1.msra.mxu0 %v1155
    %1678 = vmatprep.subr.mxu0 0.0
    %1679 = vmatpush1.msra.mxu0 %v1156
    %1680 = vmatprep.subr.mxu0 0.0
    %1681 = vmatpush1.msra.mxu0 %v1157
    %1682 = vmatprep.subr.mxu0 0.0
    %1683 = vmatpush1.msra.mxu0 0.0
    %1684 = vmatprep.subr.mxu0 0.0
    %1685 = vmatpush1.msra.mxu0 0.0
    %1686 = vmatprep.subr.mxu0 0.0
    %1687 = vmatpush1.msra.mxu0 0.0
    %1688 = vmatprep.subr.mxu0 0.0
    %1689 = vmatpush1.msra.mxu0 0.0
    %1690 = vmatprep.subr.mxu0 0.0
    %1691 = vmatpush1.msra.mxu0 0.0
    %1692 = vmatprep.subr.mxu0 0.0
    %1693 = vmatpush1.msra.mxu0 0.0
    %1694 = vmatprep.subr.mxu0 0.0
    %1695 = vmatpush1.msra.mxu0 0.0
    %1696 = vmatprep.subr.mxu0 0.0
    %1697 = vmatpush1.msra.mxu0 0.0
    %1698 = vmatprep.subr.mxu0 0.0
    %1699 = vmatpush1.msra.mxu0 0.0
    %1700 = vmatprep.subr.mxu0 0.0
    %1701 = vmatpush1.msra.mxu0 0.0
    %1702 = vmatprep.subr.mxu0 0.0
    %1703 = vmatpush1.msra.mxu0 0.0
    %1704 = vmatprep.subr.mxu0 0.0
    %1705 = vmatpush1.msra.mxu0 0.0
    %1706 = vmatprep.subr.mxu0 0.0
    %1707 = vmatpush1.msra.mxu0 0.0
    %1708 = vmatprep.subr.mxu0 0.0
    %1709 = vmatpush1.msra.mxu0 0.0
    %1710 = vmatprep.subr.mxu0 0.0
    %1711 = vmatpush1.msra.mxu0 0.0
    %1712 = vmatprep.subr.mxu0 0.0
    %1713 = vmatpush1.msra.mxu0 0.0
    %1714 = vmatprep.subr.mxu0 0.0
    %1715 = vmatpush1.msra.mxu0 0.0
    %1716 = vmatprep.subr.mxu0 0.0
    %1717 = vmatpush1.msra.mxu0 0.0
    %1718 = vmatprep.subr.mxu0 0.0
    %1719 = vmatpush1.msra.mxu0 0.0
    %1720 = vmatprep.subr.mxu0 0.0
    %1721 = vmatpush1.msra.mxu0 0.0
    %1722 = vmatprep.subr.mxu0 0.0
    %1723 = vmatpush1.msra.mxu0 0.0
    %1724 = vmatprep.subr.mxu0 0.0
    %1725 = vmatpush1.msra.mxu0 0.0
    %1726 = vmatprep.subr.mxu0 0.0
    %1727 = vmatpush1.msra.mxu0 0.0
    %1728 = vmatprep.subr.mxu0 0.0
    %1729 = vmatpush1.msra.mxu0 0.0
    %1730 = vmatprep.subr.mxu0 0.0
    %1731 = vmatpush1.msra.mxu0 0.0
    %1732 = vmatprep.subr.mxu0 0.0
    %1733 = vmatpush1.msra.mxu0 0.0
    %1734 = vmatprep.subr.mxu0 0.0
    %1735 = vmatpush1.msra.mxu0 0.0
    %1736 = vmatprep.subr.mxu0 0.0
    %1737 = vmatpush1.msra.mxu0 0.0
    %1738 = vmatprep.mubr.f32.mxu0 0.0
    %1739 = vmatmul.mubr.f32.gmra.mrb[0].mxu0 %v1672
    %v1740 = vpop.f32.mrb[0].mxu0
    %v1741 = vadd.f32 0.0, %v1740
    %v1742 = vpop.f32.mrb[0].mxu0
    %1743 = vdwg.mxu0
    %v1744 = vadd.f32 %v1671, %v1741
    %v1745 = vxor.u32 %v1744, 2147483648
    %v1746 = vmul.f32 %v1745, 1.442695
    %v1747 = vpow.pop %v1746
    %v1748 = vadd.f32 %v1747, 1.0
    %v1749 = vrcp.pop %v1748
    %v1750 = vmul.f32 1.0, %v1749
    %v1751 = vtanh.pop %v1744
    %v1752 = vmul.f32 %v1750, %v1659
    %1754 = vrot.lane.b32.xlu0 %v1751, 64
    %v1755 = vpop.permute.xlu0 %1754
    %v1757 = vmul.f32 %v1750, %v1755
    %1759 = vrot.lane.b32.xlu0 %v1757, 32
    %v1760 = vpop.permute.xlu0 %1759
    %v1762 = vadd.f32 %v1752, %v1760
    %v1763 = vtanh.pop %v1762
    %1765 = vrot.lane.b32.xlu0 %v1763, 64
    %v1766 = vpop.permute.xlu0 %1765
    %v1768 = vmul.f32 %v1750, %v1766
    %1770 = vrot.lane.b32.xlu0 %v1768, 32
    %v1771 = vpop.permute.xlu0 %1770
    %1773 = vst.msk [vmem:[#allocation2 + $0xa] sm:$0x3] %vm335, %v1771
    %v1774 = vld [vmem:[#allocation3 + $0xc] sm:$0x3]
    %v1775 = vsel %vm232, %v1771, 0
    %1777 = vmatprep.subr.mxu0 0.0
    %1778 = vmatpush1.msra.mxu0 %v1154
    %1779 = vmatprep.subr.mxu0 0.0
    %1780 = vmatpush1.msra.mxu0 %v1155
    %1781 = vmatprep.subr.mxu0 0.0
    %1782 = vmatpush1.msra.mxu0 %v1156
    %1783 = vmatprep.subr.mxu0 0.0
    %1784 = vmatpush1.msra.mxu0 %v1157
    %1785 = vmatprep.subr.mxu0 0.0
    %1786 = vmatpush1.msra.mxu0 0.0
    %1787 = vmatprep.subr.mxu0 0.0
    %1788 = vmatpush1.msra.mxu0 0.0
    %1789 = vmatprep.subr.mxu0 0.0
    %1790 = vmatpush1.msra.mxu0 0.0
    %1791 = vmatprep.subr.mxu0 0.0
    %1792 = vmatpush1.msra.mxu0 0.0
    %1793 = vmatprep.subr.mxu0 0.0
    %1794 = vmatpush1.msra.mxu0 0.0
    %1795 = vmatprep.subr.mxu0 0.0
    %1796 = vmatpush1.msra.mxu0 0.0
    %1797 = vmatprep.subr.mxu0 0.0
    %1798 = vmatpush1.msra.mxu0 0.0
    %1799 = vmatprep.subr.mxu0 0.0
    %1800 = vmatpush1.msra.mxu0 0.0
    %1801 = vmatprep.subr.mxu0 0.0
    %1802 = vmatpush1.msra.mxu0 0.0
    %1803 = vmatprep.subr.mxu0 0.0
    %1804 = vmatpush1.msra.mxu0 0.0
    %1805 = vmatprep.subr.mxu0 0.0
    %1806 = vmatpush1.msra.mxu0 0.0
    %1807 = vmatprep.subr.mxu0 0.0
    %1808 = vmatpush1.msra.mxu0 0.0
    %1809 = vmatprep.subr.mxu0 0.0
    %1810 = vmatpush1.msra.mxu0 0.0
    %1811 = vmatprep.subr.mxu0 0.0
    %1812 = vmatpush1.msra.mxu0 0.0
    %1813 = vmatprep.subr.mxu0 0.0
    %1814 = vmatpush1.msra.mxu0 0.0
    %1815 = vmatprep.subr.mxu0 0.0
    %1816 = vmatpush1.msra.mxu0 0.0
    %1817 = vmatprep.subr.mxu0 0.0
    %1818 = vmatpush1.msra.mxu0 0.0
    %1819 = vmatprep.subr.mxu0 0.0
    %1820 = vmatpush1.msra.mxu0 0.0
    %1821 = vmatprep.subr.mxu0 0.0
    %1822 = vmatpush1.msra.mxu0 0.0
    %1823 = vmatprep.subr.mxu0 0.0
    %1824 = vmatpush1.msra.mxu0 0.0
    %1825 = vmatprep.subr.mxu0 0.0
    %1826 = vmatpush1.msra.mxu0 0.0
    %1827 = vmatprep.subr.mxu0 0.0
    %1828 = vmatpush1.msra.mxu0 0.0
    %1829 = vmatprep.subr.mxu0 0.0
    %1830 = vmatpush1.msra.mxu0 0.0
    %1831 = vmatprep.subr.mxu0 0.0
    %1832 = vmatpush1.msra.mxu0 0.0
    %1833 = vmatprep.subr.mxu0 0.0
    %1834 = vmatpush1.msra.mxu0 0.0
    %1835 = vmatprep.subr.mxu0 0.0
    %1836 = vmatpush1.msra.mxu0 0.0
    %1837 = vmatprep.subr.mxu0 0.0
    %1838 = vmatpush1.msra.mxu0 0.0
    %1839 = vmatprep.subr.mxu0 0.0
    %1840 = vmatpush1.msra.mxu0 0.0
    %1841 = vmatprep.mubr.f32.mxu0 0.0
    %1842 = vmatmul.mubr.f32.gmra.mrb[0].mxu0 %v1775
    %v1843 = vpop.f32.mrb[0].mxu0
    %v1844 = vadd.f32 0.0, %v1843
    %v1845 = vpop.f32.mrb[0].mxu0
    %1846 = vdwg.mxu0
    %v1847 = vadd.f32 %v1774, %v1844
    %v1848 = vxor.u32 %v1847, 2147483648
    %v1849 = vmul.f32 %v1848, 1.442695
    %v1850 = vpow.pop %v1849
    %v1851 = vadd.f32 %v1850, 1.0
    %v1852 = vrcp.pop %v1851
    %v1853 = vmul.f32 1.0, %v1852
    %v1854 = vtanh.pop %v1847
    %v1855 = vmul.f32 %v1853, %v1762
    %1857 = vrot.lane.b32.xlu0 %v1854, 64
    %v1858 = vpop.permute.xlu0 %1857
    %v1860 = vmul.f32 %v1853, %v1858
    %1862 = vrot.lane.b32.xlu0 %v1860, 32
    %v1863 = vpop.permute.xlu0 %1862
    %v1865 = vadd.f32 %v1855, %v1863
    %v1866 = vtanh.pop %v1865
    %1868 = vrot.lane.b32.xlu0 %v1866, 64
    %v1869 = vpop.permute.xlu0 %1868
    %v1871 = vmul.f32 %v1853, %v1869
    %1873 = vrot.lane.b32.xlu0 %v1871, 32
    %v1874 = vpop.permute.xlu0 %1873
    %1876 = vst.msk [vmem:[#allocation2 + $0xc] sm:$0x3] %vm335, %v1874
    %v1877 = vld [vmem:[#allocation3 + $0xe] sm:$0x3]
    %v1878 = vsel %vm232, %v1874, 0
    %1880 = vmatprep.subr.mxu0 0.0
    %1881 = vmatpush1.msra.mxu0 %v1154
    %1882 = vmatprep.subr.mxu0 0.0
    %1883 = vmatpush1.msra.mxu0 %v1155
    %1884 = vmatprep.subr.mxu0 0.0
    %1885 = vmatpush1.msra.mxu0 %v1156
    %1886 = vmatprep.subr.mxu0 0.0
    %1887 = vmatpush1.msra.mxu0 %v1157
    %1888 = vmatprep.subr.mxu0 0.0
    %1889 = vmatpush1.msra.mxu0 0.0
    %1890 = vmatprep.subr.mxu0 0.0
    %1891 = vmatpush1.msra.mxu0 0.0
    %1892 = vmatprep.subr.mxu0 0.0
    %1893 = vmatpush1.msra.mxu0 0.0
    %1894 = vmatprep.subr.mxu0 0.0
    %1895 = vmatpush1.msra.mxu0 0.0
    %1896 = vmatprep.subr.mxu0 0.0
    %1897 = vmatpush1.msra.mxu0 0.0
    %1898 = vmatprep.subr.mxu0 0.0
    %1899 = vmatpush1.msra.mxu0 0.0
    %1900 = vmatprep.subr.mxu0 0.0
    %1901 = vmatpush1.msra.mxu0 0.0
    %1902 = vmatprep.subr.mxu0 0.0
    %1903 = vmatpush1.msra.mxu0 0.0
    %1904 = vmatprep.subr.mxu0 0.0
    %1905 = vmatpush1.msra.mxu0 0.0
    %1906 = vmatprep.subr.mxu0 0.0
    %1907 = vmatpush1.msra.mxu0 0.0
    %1908 = vmatprep.subr.mxu0 0.0
    %1909 = vmatpush1.msra.mxu0 0.0
    %1910 = vmatprep.subr.mxu0 0.0
    %1911 = vmatpush1.msra.mxu0 0.0
    %1912 = vmatprep.subr.mxu0 0.0
    %1913 = vmatpush1.msra.mxu0 0.0
    %1914 = vmatprep.subr.mxu0 0.0
    %1915 = vmatpush1.msra.mxu0 0.0
    %1916 = vmatprep.subr.mxu0 0.0
    %1917 = vmatpush1.msra.mxu0 0.0
    %1918 = vmatprep.subr.mxu0 0.0
    %1919 = vmatpush1.msra.mxu0 0.0
    %1920 = vmatprep.subr.mxu0 0.0
    %1921 = vmatpush1.msra.mxu0 0.0
    %1922 = vmatprep.subr.mxu0 0.0
    %1923 = vmatpush1.msra.mxu0 0.0
    %1924 = vmatprep.subr.mxu0 0.0
    %1925 = vmatpush1.msra.mxu0 0.0
    %1926 = vmatprep.subr.mxu0 0.0
    %1927 = vmatpush1.msra.mxu0 0.0
    %1928 = vmatprep.subr.mxu0 0.0
    %1929 = vmatpush1.msra.mxu0 0.0
    %1930 = vmatprep.subr.mxu0 0.0
    %1931 = vmatpush1.msra.mxu0 0.0
    %1932 = vmatprep.subr.mxu0 0.0
    %1933 = vmatpush1.msra.mxu0 0.0
    %1934 = vmatprep.subr.mxu0 0.0
    %1935 = vmatpush1.msra.mxu0 0.0
    %1936 = vmatprep.subr.mxu0 0.0
    %1937 = vmatpush1.msra.mxu0 0.0
    %1938 = vmatprep.subr.mxu0 0.0
    %1939 = vmatpush1.msra.mxu0 0.0
    %1940 = vmatprep.subr.mxu0 0.0
    %1941 = vmatpush1.msra.mxu0 0.0
    %1942 = vmatprep.subr.mxu0 0.0
    %1943 = vmatpush1.msra.mxu0 0.0
    %1944 = vmatprep.mubr.f32.mxu0 0.0
    %1945 = vmatmul.mubr.f32.gmra.mrb[0].mxu0 %v1878
    %v1946 = vpop.f32.mrb[0].mxu0
    %v1947 = vadd.f32 0.0, %v1946
    %v1948 = vpop.f32.mrb[0].mxu0
    %1949 = vdwg.mxu0
    %v1950 = vadd.f32 %v1877, %v1947
    %v1951 = vxor.u32 %v1950, 2147483648
    %v1952 = vmul.f32 %v1951, 1.442695
    %v1953 = vpow.pop %v1952
    %v1954 = vadd.f32 %v1953, 1.0
    %v1955 = vrcp.pop %v1954
    %v1956 = vmul.f32 1.0, %v1955
    %v1957 = vtanh.pop %v1950
    %v1958 = vmul.f32 %v1956, %v1865
    %1960 = vrot.lane.b32.xlu0 %v1957, 64
    %v1961 = vpop.permute.xlu0 %1960
    %v1963 = vmul.f32 %v1956, %v1961
    %1965 = vrot.lane.b32.xlu0 %v1963, 32
    %v1966 = vpop.permute.xlu0 %1965
    %v1968 = vadd.f32 %v1958, %v1966
    %v1969 = vtanh.pop %v1968
    %1971 = vrot.lane.b32.xlu0 %v1969, 64
    %v1972 = vpop.permute.xlu0 %1971
    %v1974 = vmul.f32 %v1956, %v1972
    %1976 = vrot.lane.b32.xlu0 %v1974, 32
    %v1977 = vpop.permute.xlu0 %1976
    %1979 = vst.msk [vmem:[#allocation2 + $0xe] sm:$0x3] %vm335, %v1977
    %v1980 = vld [vmem:[%s7] sm:$0xff]
    %v1981 = vld [vmem:[%s7 + $0x8] sm:$0xff]
    %v1982 = vld [vmem:[%s7 + $0x10] sm:$0xff]
    %v1983 = vld [vmem:[%s7 + $0x18] sm:$0xff]
    %v1984 = vld [vmem:[%s8] sm:$0x1]
    %v1985 = vld [vmem:[#allocation2] sm:$0xff]
    %v1986 = vld [vmem:[#allocation2 + $0x8] sm:$0xff]
    %v1988 = vlaneseq
    %v1989 = vshrl.u32 %v1988, 7
    %v1990 = vsub.s32 0, %v1989
    %v1991 = vrot.slane %v1984, %v1990
    %v1994 = vsel %vm232, %v1985, 0
    %v1997 = vsel %vm232, %v1986, 0
    %1999 = vmatprep.subr.mxu0 0.0
    %2000 = vmatpush1.msra.mxu0 %v1980
    %2001 = vmatprep.subr.mxu0 0.0
    %2002 = vmatpush1.msra.mxu0 %v1981
    %2003 = vmatprep.subr.mxu0 0.0
    %2004 = vmatpush1.msra.mxu0 %v1982
    %2005 = vmatprep.subr.mxu0 0.0
    %2006 = vmatpush1.msra.mxu0 %v1983
    %2007 = vmatprep.subr.mxu0 0.0
    %2008 = vmatpush1.msra.mxu0 0.0
    %2009 = vmatprep.subr.mxu0 0.0
    %2010 = vmatpush1.msra.mxu0 0.0
    %2011 = vmatprep.subr.mxu0 0.0
    %2012 = vmatpush1.msra.mxu0 0.0
    %2013 = vmatprep.subr.mxu0 0.0
    %2014 = vmatpush1.msra.mxu0 0.0
    %2015 = vmatprep.subr.mxu0 0.0
    %2016 = vmatpush1.msra.mxu0 0.0
    %2017 = vmatprep.subr.mxu0 0.0
    %2018 = vmatpush1.msra.mxu0 0.0
    %2019 = vmatprep.subr.mxu0 0.0
    %2020 = vmatpush1.msra.mxu0 0.0
    %2021 = vmatprep.subr.mxu0 0.0
    %2022 = vmatpush1.msra.mxu0 0.0
    %2023 = vmatprep.subr.mxu0 0.0
    %2024 = vmatpush1.msra.mxu0 0.0
    %2025 = vmatprep.subr.mxu0 0.0
    %2026 = vmatpush1.msra.mxu0 0.0
    %2027 = vmatprep.subr.mxu0 0.0
    %2028 = vmatpush1.msra.mxu0 0.0
    %2029 = vmatprep.subr.mxu0 0.0
    %2030 = vmatpush1.msra.mxu0 0.0
    %2031 = vmatprep.subr.mxu0 0.0
    %2032 = vmatpush1.msra.mxu0 0.0
    %2033 = vmatprep.subr.mxu0 0.0
    %2034 = vmatpush1.msra.mxu0 0.0
    %2035 = vmatprep.subr.mxu0 0.0
    %2036 = vmatpush1.msra.mxu0 0.0
    %2037 = vmatprep.subr.mxu0 0.0
    %2038 = vmatpush1.msra.mxu0 0.0
    %2039 = vmatprep.subr.mxu0 0.0
    %2040 = vmatpush1.msra.mxu0 0.0
    %2041 = vmatprep.subr.mxu0 0.0
    %2042 = vmatpush1.msra.mxu0 0.0
    %2043 = vmatprep.subr.mxu0 0.0
    %2044 = vmatpush1.msra.mxu0 0.0
    %2045 = vmatprep.subr.mxu0 0.0
    %2046 = vmatpush1.msra.mxu0 0.0
    %2047 = vmatprep.subr.mxu0 0.0
    %2048 = vmatpush1.msra.mxu0 0.0
    %2049 = vmatprep.subr.mxu0 0.0
    %2050 = vmatpush1.msra.mxu0 0.0
    %2051 = vmatprep.subr.mxu0 0.0
    %2052 = vmatpush1.msra.mxu0 0.0
    %2053 = vmatprep.subr.mxu0 0.0
    %2054 = vmatpush1.msra.mxu0 0.0
    %2055 = vmatprep.subr.mxu0 0.0
    %2056 = vmatpush1.msra.mxu0 0.0
    %2057 = vmatprep.subr.mxu0 0.0
    %2058 = vmatpush1.msra.mxu0 0.0
    %2059 = vmatprep.subr.mxu0 0.0
    %2060 = vmatpush1.msra.mxu0 0.0
    %2061 = vmatprep.subr.mxu0 0.0
    %2062 = vmatpush1.msra.mxu0 0.0
    %2063 = vmatprep.mubr.f32.mxu0 0.0
    %2064 = vmatmul.mubr.f32.gmra.mrb[0].mxu0 %v1994
    %v2065 = vpop.f32.mrb[0].mxu0
    %v2066 = vadd.f32 %v1991, %v2065
    %v2067 = vpop.f32.mrb[0].mxu0
    %2068 = vmatprep.mubr.f32.mxu0 0.0
    %2069 = vmatmul.mubr.f32.gmra.mrb[0].mxu0 %v1997
    %v2070 = vpop.f32.mrb[0].mxu0
    %v2071 = vadd.f32 %v1991, %v2070
    %v2072 = vpop.f32.mrb[0].mxu0
    %2073 = vdwg.mxu0
    %v2074 = vtanh.pop %v2066
    %v2075 = vtanh.pop %v2071
    %v2078 = vunpack.c.l.s4 1966171168
    %v2079 = vunpack.c.0.s8 %v2078
    %v2080 = vlaneseq
    %v2081 = vshrl.u32 %v2080, 7
    %v2082 = vsub.s32 %v2079, %v2081
    %v2083 = vrot.slane %v2074, %v2082
    %v2084 = vcombine.high %v2083, %v2083
    %v2086 = vunpack.c.l.s4 1966171168
    %v2087 = vunpack.c.0.s8 %v2086
    %v2088 = vlaneseq
    %v2089 = vshrl.u32 %v2088, 7
    %v2090 = vsub.s32 %v2087, %v2089
    %v2091 = vrot.slane %v2083, %v2090
    %v2093 = vunpack.c.l.s4 1966171168
    %v2094 = vunpack.c.0.s8 %v2093
    %v2095 = vlaneseq
    %v2096 = vshrl.u32 %v2095, 7
    %v2097 = vsub.s32 %v2094, %v2096
    %v2098 = vrot.slane %v2084, %v2097
    %v2101 = vcombine.high %v2091, %v2091
    %v2102 = vcombine.high %v2098, %v2098
    %v2103 = vcombine.high %v2074, %v2074
    %v2105 = vunpack.c.l.s4 1966171168
    %v2106 = vunpack.c.0.s8 %v2105
    %v2107 = vlaneseq
    %v2108 = vshrl.u32 %v2107, 7
    %v2109 = vsub.s32 %v2106, %v2108
    %v2110 = vrot.slane %v2103, %v2109
    %v2111 = vcombine.high %v2110, %v2110
    %v2113 = vunpack.c.l.s4 1966171168
    %v2114 = vunpack.c.0.s8 %v2113
    %v2115 = vlaneseq
    %v2116 = vshrl.u32 %v2115, 7
    %v2117 = vsub.s32 %v2114, %v2116
    %v2118 = vrot.slane %v2110, %v2117
    %v2120 = vunpack.c.l.s4 1966171168
    %v2121 = vunpack.c.0.s8 %v2120
    %v2122 = vlaneseq
    %v2123 = vshrl.u32 %v2122, 7
    %v2124 = vsub.s32 %v2121, %v2123
    %v2125 = vrot.slane %v2111, %v2124
    %v2126 = vcombine.high %v2118, %v2118
    %v2127 = vcombine.high %v2125, %v2125
    %v2130 = vunpack.c.l.s4 1966171168
    %v2131 = vunpack.c.0.s8 %v2130
    %v2132 = vlaneseq
    %v2133 = vshrl.u32 %v2132, 7
    %v2134 = vsub.s32 %v2131, %v2133
    %v2135 = vrot.slane %v2075, %v2134
    %v2136 = vcombine.high %v2135, %v2135
    %v2138 = vunpack.c.l.s4 1966171168
    %v2139 = vunpack.c.0.s8 %v2138
    %v2140 = vlaneseq
    %v2141 = vshrl.u32 %v2140, 7
    %v2142 = vsub.s32 %v2139, %v2141
    %v2143 = vrot.slane %v2135, %v2142
    %v2145 = vunpack.c.l.s4 1966171168
    %v2146 = vunpack.c.0.s8 %v2145
    %v2147 = vlaneseq
    %v2148 = vshrl.u32 %v2147, 7
    %v2149 = vsub.s32 %v2146, %v2148
    %v2150 = vrot.slane %v2136, %v2149
    %v2151 = vcombine.high %v2143, %v2143
    %v2152 = vcombine.high %v2150, %v2150
    %v2153 = vcombine.high %v2075, %v2075
    %v2155 = vunpack.c.l.s4 1966171168
    %v2156 = vunpack.c.0.s8 %v2155
    %v2157 = vlaneseq
    %v2158 = vshrl.u32 %v2157, 7
    %v2159 = vsub.s32 %v2156, %v2158
    %v2160 = vrot.slane %v2153, %v2159
    %v2161 = vcombine.high %v2160, %v2160
    %v2163 = vunpack.c.l.s4 1966171168
    %v2164 = vunpack.c.0.s8 %v2163
    %v2165 = vlaneseq
    %v2166 = vshrl.u32 %v2165, 7
    %v2167 = vsub.s32 %v2164, %v2166
    %v2168 = vrot.slane %v2160, %v2167
    %v2170 = vunpack.c.l.s4 1966171168
    %v2171 = vunpack.c.0.s8 %v2170
    %v2172 = vlaneseq
    %v2173 = vshrl.u32 %v2172, 7
    %v2174 = vsub.s32 %v2171, %v2173
    %v2175 = vrot.slane %v2161, %v2174
    %v2176 = vcombine.high %v2168, %v2168
    %v2177 = vcombine.high %v2175, %v2175
    %v2178 = vlaneseq
    %v2179 = vshrl.u32 %v2178, 7
    %v2180 = vsub.s32 0, %v2179
    %v2181 = vrot.slane %v2101, %v2180
    %v2182 = vlaneseq
    %v2183 = vshrl.u32 %v2182, 7
    %v2184 = vsub.s32 0, %v2183
    %v2185 = vrot.slane %v2102, %v2184
    %v2188 = vlaneseq
    %v2189 = vshrl.u32 %v2188, 7
    %v2190 = vsub.s32 0, %v2189
    %v2191 = vrot.slane %v2118, %v2190
    %v2192 = vlaneseq
    %v2193 = vshrl.u32 %v2192, 7
    %v2194 = vsub.s32 0, %v2193
    %v2195 = vrot.slane %v2125, %v2194
    %v2198 = vlaneseq
    %v2199 = vshrl.u32 %v2198, 7
    %v2200 = vsub.s32 0, %v2199
    %v2201 = vrot.slane %v2126, %v2200
    %v2202 = vlaneseq
    %v2203 = vshrl.u32 %v2202, 7
    %v2204 = vsub.s32 0, %v2203
    %v2205 = vrot.slane %v2127, %v2204
    %v2208 = vlaneseq
    %v2209 = vshrl.u32 %v2208, 7
    %v2210 = vsub.s32 0, %v2209
    %v2211 = vrot.slane %v2143, %v2210
    %v2212 = vlaneseq
    %v2213 = vshrl.u32 %v2212, 7
    %v2214 = vsub.s32 0, %v2213
    %v2215 = vrot.slane %v2150, %v2214
    %v2218 = vlaneseq
    %v2219 = vshrl.u32 %v2218, 7
    %v2220 = vsub.s32 0, %v2219
    %v2221 = vrot.slane %v2151, %v2220
    %v2222 = vlaneseq
    %v2223 = vshrl.u32 %v2222, 7
    %v2224 = vsub.s32 0, %v2223
    %v2225 = vrot.slane %v2152, %v2224
    %v2228 = vlaneseq
    %v2229 = vshrl.u32 %v2228, 7
    %v2230 = vsub.s32 0, %v2229
    %v2231 = vrot.slane %v2168, %v2230
    %v2232 = vlaneseq
    %v2233 = vshrl.u32 %v2232, 7
    %v2234 = vsub.s32 0, %v2233
    %v2235 = vrot.slane %v2175, %v2234
    %v2238 = vlaneseq
    %v2239 = vshrl.u32 %v2238, 7
    %v2240 = vsub.s32 0, %v2239
    %v2241 = vrot.slane %v2176, %v2240
    %v2242 = vlaneseq
    %v2243 = vshrl.u32 %v2242, 7
    %v2244 = vsub.s32 0, %v2243
    %v2245 = vrot.slane %v2177, %v2244
    %vm2248 = vcmask 1040384
    %v2249 = vsel %vm2248, %v2091, %v2181
    %v2250 = vsel %vm2248, %v2098, %v2185
    %v2251 = vsel %vm125, %v2249, %v2191
    %v2252 = vsel %vm125, %v2250, %v2195
    %vm2253 = vcmask 1042432
    %v2254 = vsel %vm2253, %v2251, %v2201
    %v2255 = vsel %vm2253, %v2252, %v2205
    %v2256 = vsel %vm127, %v2254, %v2211
    %v2257 = vsel %vm127, %v2255, %v2215
    %vm2258 = vcmask 1044480
    %v2259 = vsel %vm2258, %v2256, %v2221
    %v2260 = vsel %vm2258, %v2257, %v2225
    %v2261 = vsel %vm129, %v2259, %v2231
    %v2262 = vsel %vm129, %v2260, %v2235
    %vm2263 = vcmask 1046528
    %v2264 = vsel %vm2263, %v2261, %v2241
    %v2265 = vsel %vm2263, %v2262, %v2245
    %vm2266 = vcmask 31744
    %2267 = vst.msk [vmem:[%s9] sm:$0xff] %vm2266, %v2264
    %2268 = vst.msk [vmem:[%s9 + $0x8] sm:$0xff] %vm2266, %v2265
    // Predicated region
    $region54: #{actor_lstm_forward.1} parent=1 // pred_check
      _
    $region55: #{actor_lstm_forward.1} parent=1 // pred_check_branch
      %2270 = sbr.rel (0) target = $region57
    $region56: #{actor_lstm_forward.1} parent=1 // pred_region
      _
    $region57: #{actor_lstm_forward.1} parent=1 // pred_fallthru
      _
    // Predicated region
    $region58: #{actor_lstm_forward.1} parent=1 // pred_check
      _
    $region59: #{actor_lstm_forward.1} parent=1 // pred_check_branch
      %2272 = sbr.rel (0) target = $region61
    $region60: #{actor_lstm_forward.1} parent=1 // pred_region
      _
    $region61: #{actor_lstm_forward.1} parent=1 // pred_fallthru
      _
    %2273 = vsyncpa [#allocation5], 1
    %2274 = vsyncpa [#allocation7], 1
    %2275 = vsyncpa [#allocation10], 1

</llo_original>
